<compile_context>
chip_gen: v7x
topology: tpu7x:2x2x1
jax: 0.10.0
libtpu: 0.0.40
codegen_flags: <defaults>
</compile_context>

<pallas_src>
import functools

import jax
import jax.numpy as jnp
import numpy as np
from jax.experimental import pallas as pl
from jax.experimental.pallas import tpu as pltpu

EPS = 1e-5


# --------------------------------------------------------------------------- #
# Kernels
# --------------------------------------------------------------------------- #
def _conv3x3_bn_stats_kernel(x_ref, w_ref, scale_ref, shift_ref,
                             y_ref, sum_ref, ssq_ref, patch_ref,
                             *, H, W, apply_preact):
    """One image per grid step: 3x3 conv (stride=1, pad=1) as one MXU matmul.

    x_ref:     (Cin,  H*W)   lane-dense activations for this image
    w_ref:     (Cout, 9*Cin) weights, K ordered (kh, kw, cin)
    scale_ref: (Cin, 1)      per-channel affine scale (fused BN pre-activation)
    shift_ref: (Cin, 1)      per-channel affine shift
    y_ref:     (Cout, H*W)   raw conv output (f32)
    sum_ref:   (Cout, 1)     per-tile sum   of y   (BN partial)
    ssq_ref:   (Cout, 1)     per-tile sum   of y^2 (BN partial)
    patch_ref: (9*Cin, H*W)  VMEM scratch: im2col slab
    """
    HW = H * W
    Cin = x_ref.shape[0]

    x = x_ref[...].astype(jnp.float32)
    if apply_preact:
        # fused bn1-affine + ReLU applied to the conv2 input
        x = jnp.maximum(x * scale_ref[...] + shift_ref[...], 0.0)

    # w-coordinate of every flattened pixel, used to mask the pad=1 border.
    p = jax.lax.broadcasted_iota(jnp.int32, (1, HW), 1)
    if W & (W - 1) == 0:
        w_idx = jnp.bitwise_and(p, W - 1)
    else:
        w_idx = p % W

    # Build the im2col slab: row block t = (dh+1)*3 + (dw+1) holds the image
    # shifted by (dh, dw), with zeros wherever the 3x3 window falls outside
    # the image (== the conv's zero padding).  The staging buffer is tiny
    # (9*Cin x H*W) and replaces the previous full-size padded scratch.
    patch_ref[...] = jnp.zeros_like(patch_ref)
    taps = [(dh, dw) for dh in (-1, 0, 1) for dw in (-1, 0, 1)]
    for t, (dh, dw) in enumerate(taps):
        # mask the horizontal wrap (applied in source coordinates)
        if dw == 1:
            xm = jnp.where(w_idx >= 1, x, 0.0)
        elif dw == -1:
            xm = jnp.where(w_idx <= W - 2, x, 0.0)
        else:
            xm = x
        d = dh * W + dw          # flat shift: tap[p] = x[p + d] when valid
        r0 = t * Cin
        if d > 0:
            patch_ref[r0:r0 + Cin, 0:HW - d] = xm[:, d:HW]
        elif d < 0:
            start = -d
            patch_ref[r0:r0 + Cin, start:HW] = xm[:, 0:HW + d]
        else:
            patch_ref[r0:r0 + Cin, :] = xm

    # Single MXU matmul per conv: (Cout, 9*Cin) @ (9*Cin, H*W) -> (Cout, H*W)
    y = jnp.dot(w_ref[...].astype(jnp.float32), patch_ref[...],
                preferred_element_type=jnp.float32)
    y_ref[...] = y

    # One-pass BatchNorm partials for this tile (finalised in JAX).
    sum_ref[...] = jnp.sum(y, axis=1, keepdims=True)
    ssq_ref[...] = jnp.sum(y * y, axis=1, keepdims=True)


def _bn_add_relu_kernel(y_ref, res_ref, scale_ref, shift_ref, out_ref):
    """bn2-affine + residual add + ReLU, lane-dense elementwise."""
    y = y_ref[...]
    r = res_ref[...].astype(jnp.float32)
    out = jnp.maximum(y * scale_ref[...] + shift_ref[...] + r, 0.0)
    out_ref[...] = out.astype(out_ref.dtype)


# --------------------------------------------------------------------------- #
# pallas_call wrappers
# --------------------------------------------------------------------------- #
def _conv3x3_with_stats(x_flat, w_flat, scale, shift, *, H, W, apply_preact):
    N, Cin, HW = x_flat.shape
    Cout = w_flat.shape[0]
    kernel = functools.partial(_conv3x3_bn_stats_kernel, H=H, W=W,
                               apply_preact=apply_preact)
    flops = 2 * N * HW * (9 * Cin) * Cout + 6 * N * Cin * HW
    bytes_accessed = 4 * (N * Cin * HW + Cout * 9 * Cin
                          + N * Cout * HW + 2 * N * Cout + 2 * Cin)
    return pl.pallas_call(
        kernel,
        grid=(N,),
        in_specs=[
            pl.BlockSpec((None, Cin, HW), lambda n: (n, 0, 0)),
            pl.BlockSpec((Cout, 9 * Cin), lambda n: (0, 0)),
            pl.BlockSpec((Cin, 1), lambda n: (0, 0)),
            pl.BlockSpec((Cin, 1), lambda n: (0, 0)),
        ],
        out_specs=[
            pl.BlockSpec((None, Cout, HW), lambda n: (n, 0, 0)),
            pl.BlockSpec((None, Cout, 1), lambda n: (n, 0, 0)),
            pl.BlockSpec((None, Cout, 1), lambda n: (n, 0, 0)),
        ],
        out_shape=[
            jax.ShapeDtypeStruct((N, Cout, HW), jnp.float32),
            jax.ShapeDtypeStruct((N, Cout, 1), jnp.float32),
            jax.ShapeDtypeStruct((N, Cout, 1), jnp.float32),
        ],
        scratch_shapes=[pltpu.VMEM((9 * Cin, HW), jnp.float32)],
        compiler_params=pltpu.CompilerParams(
            dimension_semantics=("parallel",),
            vmem_limit_bytes=32 * 1024 * 1024),
        cost_estimate=pl.CostEstimate(flops=int(flops), transcendentals=0,
                                      bytes_accessed=int(bytes_accessed)),
    )(x_flat, w_flat, scale, shift)


def _bn_add_relu(y_flat, res_flat, scale, shift):
    N, C, HW = y_flat.shape
    bytes_accessed = 4 * (3 * N * C * HW + 2 * C)
    return pl.pallas_call(
        _bn_add_relu_kernel,
        grid=(N,),
        in_specs=[
            pl.BlockSpec((None, C, HW), lambda n: (n, 0, 0)),
            pl.BlockSpec((None, C, HW), lambda n: (n, 0, 0)),
            pl.BlockSpec((C, 1), lambda n: (0, 0)),
            pl.BlockSpec((C, 1), lambda n: (0, 0)),
        ],
        out_specs=pl.BlockSpec((None, C, HW), lambda n: (n, 0, 0)),
        out_shape=jax.ShapeDtypeStruct((N, C, HW), res_flat.dtype),
        compiler_params=pltpu.CompilerParams(
            dimension_semantics=("parallel",),
            vmem_limit_bytes=32 * 1024 * 1024),
        cost_estimate=pl.CostEstimate(flops=int(3 * N * C * HW),
                                      transcendentals=0,
                                      bytes_accessed=int(bytes_accessed)),
    )(y_flat, res_flat, scale, shift)


# --------------------------------------------------------------------------- #
# Full BasicBlock forward
# --------------------------------------------------------------------------- #
def basic_block_forward(x_nchw, w1, gamma1, beta1, w2, gamma2, beta2):
    """x_nchw: (N, C, H, W); w1/w2: PyTorch OIHW (Cout, Cin, 3, 3)."""
    N, Cin, H, W = x_nchw.shape
    Cout = w1.shape[0]
    assert Cin == Cout, "identity residual requires inplanes == planes"
    HW = H * W
    count = N * HW

    x_flat = x_nchw.reshape(N, Cin, HW)                         # free reshape
    # weights: OIHW -> (Cout, kh, kw, Cin) -> (Cout, 9*Cin), matching tap order
    w1_k = jnp.transpose(w1, (0, 2, 3, 1)).reshape(Cout, 9 * Cin)
    w2_k = jnp.transpose(w2, (0, 2, 3, 1)).reshape(Cout, 9 * Cout)
    ident = jnp.ones((Cin, 1), jnp.float32)
    zero = jnp.zeros((Cin, 1), jnp.float32)

    # ---- pass 1: conv1 + BN1 partial statistics ---------------------------
    y1, s1, q1 = _conv3x3_with_stats(x_flat, w1_k, ident, zero,
                                     H=H, W=W, apply_preact=False)
    mean1 = jnp.sum(s1, axis=0) / count                         # (Cout, 1)
    var1 = jnp.sum(q1, axis=0) / count - mean1 * mean1          # biased var
    scale1 = gamma1.reshape(Cout, 1) * jax.lax.rsqrt(var1 + EPS)
    shift1 = beta1.reshape(Cout, 1) - mean1 * scale1

    # ---- pass 2: fused bn1+relu pre-activation, conv2 + BN2 partials ------
    y2, s2, q2 = _conv3x3_with_stats(y1, w2_k, scale1, shift1,
                                     H=H, W=W, apply_preact=True)
    mean2 = jnp.sum(s2, axis=0) / count
    var2 = jnp.sum(q2, axis=0) / count - mean2 * mean2
    scale2 = gamma2.reshape(Cout, 1) * jax.lax.rsqrt(var2 + EPS)
    shift2 = beta2.reshape(Cout, 1) - mean2 * scale2

    # ---- pass 3: bn2 + residual + relu ------------------------------------
    out_flat = _bn_add_relu(y2, x_flat, scale2, shift2)
    return out_flat.reshape(N, Cout, H, W)                      # free reshape


# --------------------------------------------------------------------------- #
# Pure-JAX reference (PyTorch BasicBlock forward, training-mode BN)
# --------------------------------------------------------------------------- #
def basic_block_reference(x, w1, g1, b1, w2, g2, b2):
    def conv(x, w):
        return jax.lax.conv_general_dilated(
            x, w, window_strides=(1, 1), padding=((1, 1), (1, 1)),
            dimension_numbers=('NCHW', 'OIHW', 'NCHW'))

    def bn(x, g, b):
        mean = jnp.mean(x, axis=(0, 2, 3), keepdims=True)
        var = jnp.mean((x - mean) ** 2, axis=(0, 2, 3), keepdims=True)
        return ((x - mean) * jax.lax.rsqrt(var + EPS)
                * g.reshape(1, -1, 1, 1) + b.reshape(1, -1, 1, 1))

    out = jnp.maximum(bn(conv(x, w1), g1, b1), 0.0)
    out = bn(conv(out, w2), g2, b2)
    return jnp.maximum(out + x, 0.0)


if __name__ == "__main__":
    N, C, H, W = 2, 4, 16, 16            # inplanes = planes = 4, stride = 1
    inplanes = planes = C

    key = jax.random.PRNGKey(0)
    k_x, k_w1, k_w2, k_g1, k_b1, k_g2, k_b2 = jax.random.split(key, 7)

    x = jax.random.normal(k_x, (N, C, H, W), jnp.float32)

    fan_in1 = inplanes * 9
    fan_in2 = planes * 9
    w1 = jax.random.normal(k_w1, (planes, inplanes, 3, 3), jnp.float32) * np.sqrt(2.0 / fan_in1)
    w2 = jax.random.normal(k_w2, (planes, planes, 3, 3), jnp.float32) * np.sqrt(2.0 / fan_in2)
    gamma1 = 1.0 + 0.1 * jax.random.normal(k_g1, (planes,), jnp.float32)
    beta1 = 0.1 * jax.random.normal(k_b1, (planes,), jnp.float32)
    gamma2 = 1.0 + 0.1 * jax.random.normal(k_g2, (planes,), jnp.float32)
    beta2 = 0.1 * jax.random.normal(k_b2, (planes,), jnp.float32)

    fwd = jax.jit(basic_block_forward)
    out = fwd(x, w1, gamma1, beta1, w2, gamma2, beta2)
    out = jax.block_until_ready(out)

    ref = basic_block_reference(x, w1, gamma1, beta1, w2, gamma2, beta2)
    np.testing.assert_allclose(np.asarray(out), np.asarray(ref), rtol=1e-4, atol=1e-4)

    print("KERNEL_OK")
</pallas_src>

<mosaic_0001>
module attributes {stable_mosaic.version = 11 : i64} {
  func.func @_conv3x3_bn_stats_kernel(%arg0: i32, %arg1: memref<1x4x256xf32, #tpu.memory_space<vmem>>, %arg2: memref<4x36xf32, #tpu.memory_space<vmem>>, %arg3: memref<4x1xf32, #tpu.memory_space<vmem>>, %arg4: memref<4x1xf32, #tpu.memory_space<vmem>>, %arg5: memref<1x4x256xf32, #tpu.memory_space<vmem>>, %arg6: memref<1x4x1xf32, #tpu.memory_space<vmem>>, %arg7: memref<1x4x1xf32, #tpu.memory_space<vmem>>, %arg8: memref<36x256xf32, #tpu.memory_space<vmem>>) attributes {dimension_semantics = [#tpu.dimension_semantics<parallel>], iteration_bounds = array<i64: 2>, scalar_prefetch = 0 : i64, scratch_operands = 1 : i64, tpu.core_type = #tpu.core_type<tc>, window_params = [{transform_indices = @transform_0, window_bounds = array<i64: 1, 4, 256>}, {pipeline_mode = #tpu.pipeline_mode<synchronous>, transform_indices = @transform_1, window_bounds = array<i64: 4, 36>}, {pipeline_mode = #tpu.pipeline_mode<synchronous>, transform_indices = @transform_2, window_bounds = array<i64: 4, 1>}, {pipeline_mode = #tpu.pipeline_mode<synchronous>, transform_indices = @transform_3, window_bounds = array<i64: 4, 1>}, {transform_indices = @transform_4, window_bounds = array<i64: 1, 4, 256>}, {transform_indices = @transform_5, window_bounds = array<i64: 1, 4, 1>}, {transform_indices = @transform_6, window_bounds = array<i64: 1, 4, 1>}]} {
    %c0 = arith.constant 0 : index
    %c0_0 = arith.constant 0 : index
    %c0_1 = arith.constant 0 : index
    %0 = vector.load %arg1[%c0, %c0_0, %c0_1] : memref<1x4x256xf32, #tpu.memory_space<vmem>>, vector<1x4x256xf32>
    %1 = vector.shape_cast %0 : vector<1x4x256xf32> to vector<4x256xf32>
    %2 = tpu.iota {dimensions = array<i32: 1>} : vector<1x256xi32>
    %c15_i32 = arith.constant 15 : i32
    %3 = vector.broadcast %c15_i32 : i32 to vector<1x256xi32>
    %4 = arith.andi %2, %3 : vector<1x256xi32>
    %cst = arith.constant 0.000000e+00 : f32
    %5 = vector.broadcast %cst : f32 to vector<36x256xf32>
    %c0_2 = arith.constant 0 : index
    %c0_3 = arith.constant 0 : index
    %6 = vector.load %arg8[%c0_2, %c0_3] : memref<36x256xf32, #tpu.memory_space<vmem>>, vector<36x256xf32>
    tpu.vector_store %arg8[%c0_2, %c0_3], %5 {strides = array<i32>} : memref<36x256xf32, #tpu.memory_space<vmem>>, vector<36x256xf32>,
    %c14_i32 = arith.constant 14 : i32
    %7 = vector.broadcast %c14_i32 : i32 to vector<1x256xi32>
    %8 = arith.cmpi sle, %4, %7 : vector<1x256xi32>
    %cst_4 = arith.constant 0.000000e+00 : f32
    %9 = vector.shape_cast %8 : vector<1x256xi1> to vector<1x256xi1>
    %10 = vector.broadcast %9 : vector<1x256xi1> to vector<4x256xi1>
    %11 = vector.broadcast %cst_4 : f32 to vector<4x256xf32>
    %12 = arith.select %10, %1, %11 : vector<4x256xi1>, vector<4x256xf32>
    %13 = vector.extract_strided_slice %12 {offsets = [0, 0], sizes = [4, 239], strides = [1, 1]} : vector<4x256xf32> to vector<4x239xf32>
    %c0_5 = arith.constant 0 : index
    %c17 = arith.constant 17 : index
    %14 = vector.load %arg8[%c0_5, %c17] : memref<36x256xf32, #tpu.memory_space<vmem>>, vector<4x239xf32>
    tpu.vector_store %arg8[%c0_5, %c17], %13 {strides = array<i32>} : memref<36x256xf32, #tpu.memory_space<vmem>>, vector<4x239xf32>,
    %15 = vector.extract_strided_slice %1 {offsets = [0, 0], sizes = [4, 240], strides = [1, 1]} : vector<4x256xf32> to vector<4x240xf32>
    %c4 = arith.constant 4 : index
    %c16 = arith.constant 16 : index
    %16 = vector.load %arg8[%c4, %c16] : memref<36x256xf32, #tpu.memory_space<vmem>>, vector<4x240xf32>
    tpu.vector_store %arg8[%c4, %c16], %15 {strides = array<i32>} : memref<36x256xf32, #tpu.memory_space<vmem>>, vector<4x240xf32>,
    %c1_i32 = arith.constant 1 : i32
    %17 = vector.broadcast %c1_i32 : i32 to vector<1x256xi32>
    %18 = arith.cmpi sge, %4, %17 : vector<1x256xi32>
    %cst_6 = arith.constant 0.000000e+00 : f32
    %19 = vector.shape_cast %18 : vector<1x256xi1> to vector<1x256xi1>
    %20 = vector.broadcast %19 : vector<1x256xi1> to vector<4x256xi1>
    %21 = vector.broadcast %cst_6 : f32 to vector<4x256xf32>
    %22 = arith.select %20, %1, %21 : vector<4x256xi1>, vector<4x256xf32>
    %23 = vector.extract_strided_slice %22 {offsets = [0, 0], sizes = [4, 241], strides = [1, 1]} : vector<4x256xf32> to vector<4x241xf32>
    %c8 = arith.constant 8 : index
    %c15 = arith.constant 15 : index
    %24 = vector.load %arg8[%c8, %c15] : memref<36x256xf32, #tpu.memory_space<vmem>>, vector<4x241xf32>
    tpu.vector_store %arg8[%c8, %c15], %23 {strides = array<i32>} : memref<36x256xf32, #tpu.memory_space<vmem>>, vector<4x241xf32>,
    %c14_i32_7 = arith.constant 14 : i32
    %25 = vector.broadcast %c14_i32_7 : i32 to vector<1x256xi32>
    %26 = arith.cmpi sle, %4, %25 : vector<1x256xi32>
    %cst_8 = arith.constant 0.000000e+00 : f32
    %27 = vector.shape_cast %26 : vector<1x256xi1> to vector<1x256xi1>
    %28 = vector.broadcast %27 : vector<1x256xi1> to vector<4x256xi1>
    %29 = vector.broadcast %cst_8 : f32 to vector<4x256xf32>
    %30 = arith.select %28, %1, %29 : vector<4x256xi1>, vector<4x256xf32>
    %31 = vector.extract_strided_slice %30 {offsets = [0, 0], sizes = [4, 255], strides = [1, 1]} : vector<4x256xf32> to vector<4x255xf32>
    %c12 = arith.constant 12 : index
    %c1 = arith.constant 1 : index
    %32 = vector.load %arg8[%c12, %c1] : memref<36x256xf32, #tpu.memory_space<vmem>>, vector<4x255xf32>
    tpu.vector_store %arg8[%c12, %c1], %31 {strides = array<i32>} : memref<36x256xf32, #tpu.memory_space<vmem>>, vector<4x255xf32>,
    %c16_9 = arith.constant 16 : index
    %c0_10 = arith.constant 0 : index
    %33 = vector.load %arg8[%c16_9, %c0_10] : memref<36x256xf32, #tpu.memory_space<vmem>>, vector<4x256xf32>
    tpu.vector_store %arg8[%c16_9, %c0_10], %1 {strides = array<i32>} : memref<36x256xf32, #tpu.memory_space<vmem>>, vector<4x256xf32>,
    %c1_i32_11 = arith.constant 1 : i32
    %34 = vector.broadcast %c1_i32_11 : i32 to vector<1x256xi32>
    %35 = arith.cmpi sge, %4, %34 : vector<1x256xi32>
    %cst_12 = arith.constant 0.000000e+00 : f32
    %36 = vector.shape_cast %35 : vector<1x256xi1> to vector<1x256xi1>
    %37 = vector.broadcast %36 : vector<1x256xi1> to vector<4x256xi1>
    %38 = vector.broadcast %cst_12 : f32 to vector<4x256xf32>
    %39 = arith.select %37, %1, %38 : vector<4x256xi1>, vector<4x256xf32>
    %40 = vector.extract_strided_slice %39 {offsets = [0, 1], sizes = [4, 255], strides = [1, 1]} : vector<4x256xf32> to vector<4x255xf32>
    %c20 = arith.constant 20 : index
    %c0_13 = arith.constant 0 : index
    %41 = vector.load %arg8[%c20, %c0_13] : memref<36x256xf32, #tpu.memory_space<vmem>>, vector<4x255xf32>
    tpu.vector_store %arg8[%c20, %c0_13], %40 {strides = array<i32>} : memref<36x256xf32, #tpu.memory_space<vmem>>, vector<4x255xf32>,
    %c14_i32_14 = arith.constant 14 : i32
    %42 = vector.broadcast %c14_i32_14 : i32 to vector<1x256xi32>
    %43 = arith.cmpi sle, %4, %42 : vector<1x256xi32>
    %cst_15 = arith.constant 0.000000e+00 : f32
    %44 = vector.shape_cast %43 : vector<1x256xi1> to vector<1x256xi1>
    %45 = vector.broadcast %44 : vector<1x256xi1> to vector<4x256xi1>
    %46 = vector.broadcast %cst_15 : f32 to vector<4x256xf32>
    %47 = arith.select %45, %1, %46 : vector<4x256xi1>, vector<4x256xf32>
    %48 = vector.extract_strided_slice %47 {offsets = [0, 15], sizes = [4, 241], strides = [1, 1]} : vector<4x256xf32> to vector<4x241xf32>
    %c24 = arith.constant 24 : index
    %c0_16 = arith.constant 0 : index
    %49 = vector.load %arg8[%c24, %c0_16] : memref<36x256xf32, #tpu.memory_space<vmem>>, vector<4x241xf32>
    tpu.vector_store %arg8[%c24, %c0_16], %48 {strides = array<i32>} : memref<36x256xf32, #tpu.memory_space<vmem>>, vector<4x241xf32>,
    %50 = vector.extract_strided_slice %1 {offsets = [0, 16], sizes = [4, 240], strides = [1, 1]} : vector<4x256xf32> to vector<4x240xf32>
    %c28 = arith.constant 28 : index
    %c0_17 = arith.constant 0 : index
    %51 = vector.load %arg8[%c28, %c0_17] : memref<36x256xf32, #tpu.memory_space<vmem>>, vector<4x240xf32>
    tpu.vector_store %arg8[%c28, %c0_17], %50 {strides = array<i32>} : memref<36x256xf32, #tpu.memory_space<vmem>>, vector<4x240xf32>,
    %c1_i32_18 = arith.constant 1 : i32
    %52 = vector.broadcast %c1_i32_18 : i32 to vector<1x256xi32>
    %53 = arith.cmpi sge, %4, %52 : vector<1x256xi32>
    %cst_19 = arith.constant 0.000000e+00 : f32
    %54 = vector.shape_cast %53 : vector<1x256xi1> to vector<1x256xi1>
    %55 = vector.broadcast %54 : vector<1x256xi1> to vector<4x256xi1>
    %56 = vector.broadcast %cst_19 : f32 to vector<4x256xf32>
    %57 = arith.select %55, %1, %56 : vector<4x256xi1>, vector<4x256xf32>
    %58 = vector.extract_strided_slice %57 {offsets = [0, 17], sizes = [4, 239], strides = [1, 1]} : vector<4x256xf32> to vector<4x239xf32>
    %c32 = arith.constant 32 : index
    %c0_20 = arith.constant 0 : index
    %59 = vector.load %arg8[%c32, %c0_20] : memref<36x256xf32, #tpu.memory_space<vmem>>, vector<4x239xf32>
    tpu.vector_store %arg8[%c32, %c0_20], %58 {strides = array<i32>} : memref<36x256xf32, #tpu.memory_space<vmem>>, vector<4x239xf32>,
    %c0_21 = arith.constant 0 : index
    %c0_22 = arith.constant 0 : index
    %60 = vector.load %arg2[%c0_21, %c0_22] : memref<4x36xf32, #tpu.memory_space<vmem>>, vector<4x36xf32>
    %c0_23 = arith.constant 0 : index
    %c0_24 = arith.constant 0 : index
    %61 = vector.load %arg8[%c0_23, %c0_24] : memref<36x256xf32, #tpu.memory_space<vmem>>, vector<36x256xf32>
    %cst_25 = arith.constant dense<0.000000e+00> : vector<4x256xf32>
    %62 = tpu.matmul %60, %61, %cst_25 {dimension_numbers = #tpu.dot_dimension_numbers<[1], [0], [0], [1], [0, 0, 1, 1], [], []>} : vector<4x36xf32>, vector<36x256xf32>, vector<4x256xf32> -> vector<4x256xf32>
    %c0_26 = arith.constant 0 : index
    %c0_27 = arith.constant 0 : index
    %c0_28 = arith.constant 0 : index
    %63 = vector.load %arg5[%c0_26, %c0_27, %c0_28] : memref<1x4x256xf32, #tpu.memory_space<vmem>>, vector<1x4x256xf32>
    %64 = vector.shape_cast %63 : vector<1x4x256xf32> to vector<4x256xf32>
    %65 = vector.shape_cast %62 : vector<4x256xf32> to vector<1x4x256xf32>
    tpu.vector_store %arg5[%c0_26, %c0_27, %c0_28], %65 {strides = array<i32>} : memref<1x4x256xf32, #tpu.memory_space<vmem>>, vector<1x4x256xf32>,
    %cst_29 = arith.constant dense<0.000000e+00> : vector<4xf32>
    %66 = vector.multi_reduction <add>, %62, %cst_29 [1] : vector<4x256xf32> to vector<4xf32>
    %67 = vector.shape_cast %66 : vector<4xf32> to vector<4x1xf32>
    %c0_30 = arith.constant 0 : index
    %c0_31 = arith.constant 0 : index
    %c0_32 = arith.constant 0 : index
    %68 = vector.load %arg6[%c0_30, %c0_31, %c0_32] : memref<1x4x1xf32, #tpu.memory_space<vmem>>, vector<1x4x1xf32>
    %69 = vector.shape_cast %68 : vector<1x4x1xf32> to vector<4x1xf32>
    %70 = vector.shape_cast %67 : vector<4x1xf32> to vector<1x4x1xf32>
    tpu.vector_store %arg6[%c0_30, %c0_31, %c0_32], %70 {strides = array<i32>} : memref<1x4x1xf32, #tpu.memory_space<vmem>>, vector<1x4x1xf32>,
    %71 = arith.mulf %62, %62 : vector<4x256xf32>
    %cst_33 = arith.constant dense<0.000000e+00> : vector<4xf32>
    %72 = vector.multi_reduction <add>, %71, %cst_33 [1] : vector<4x256xf32> to vector<4xf32>
    %73 = vector.shape_cast %72 : vector<4xf32> to vector<4x1xf32>
    %c0_34 = arith.constant 0 : index
    %c0_35 = arith.constant 0 : index
    %c0_36 = arith.constant 0 : index
    %74 = vector.load %arg7[%c0_34, %c0_35, %c0_36] : memref<1x4x1xf32, #tpu.memory_space<vmem>>, vector<1x4x1xf32>
    %75 = vector.shape_cast %74 : vector<1x4x1xf32> to vector<4x1xf32>
    %76 = vector.shape_cast %73 : vector<4x1xf32> to vector<1x4x1xf32>
    tpu.vector_store %arg7[%c0_34, %c0_35, %c0_36], %76 {strides = array<i32>} : memref<1x4x1xf32, #tpu.memory_space<vmem>>, vector<1x4x1xf32>,
    return
  }
  func.func @transform_0(%arg0: i32) -> (i32, i32, i32) {
    %c0_i32 = arith.constant 0 : i32
    %c0_i32_0 = arith.constant 0 : i32
    %c0_i32_1 = arith.constant 0 : i32
    return %arg0, %c0_i32, %c0_i32_0 : i32, i32, i32
  }
  func.func @transform_1(%arg0: i32) -> (i32, i32) {
    %c0_i32 = arith.constant 0 : i32
    %c0_i32_0 = arith.constant 0 : i32
    %c0_i32_1 = arith.constant 0 : i32
    return %c0_i32, %c0_i32_0 : i32, i32
  }
  func.func @transform_2(%arg0: i32) -> (i32, i32) {
    %c0_i32 = arith.constant 0 : i32
    %c0_i32_0 = arith.constant 0 : i32
    %c0_i32_1 = arith.constant 0 : i32
    return %c0_i32, %c0_i32_0 : i32, i32
  }
  func.func @transform_3(%arg0: i32) -> (i32, i32) {
    %c0_i32 = arith.constant 0 : i32
    %c0_i32_0 = arith.constant 0 : i32
    %c0_i32_1 = arith.constant 0 : i32
    return %c0_i32, %c0_i32_0 : i32, i32
  }
  func.func @transform_4(%arg0: i32) -> (i32, i32, i32) {
    %c0_i32 = arith.constant 0 : i32
    %c0_i32_0 = arith.constant 0 : i32
    %c0_i32_1 = arith.constant 0 : i32
    return %arg0, %c0_i32, %c0_i32_0 : i32, i32, i32
  }
  func.func @transform_5(%arg0: i32) -> (i32, i32, i32) {
    %c0_i32 = arith.constant 0 : i32
    %c0_i32_0 = arith.constant 0 : i32
    %c0_i32_1 = arith.constant 0 : i32
    return %arg0, %c0_i32, %c0_i32_0 : i32, i32, i32
  }
  func.func @transform_6(%arg0: i32) -> (i32, i32, i32) {
    %c0_i32 = arith.constant 0 : i32
    %c0_i32_0 = arith.constant 0 : i32
    %c0_i32_1 = arith.constant 0 : i32
    return %arg0, %c0_i32, %c0_i32_0 : i32, i32, i32
  }
}

module attributes {stable_mosaic.version = 11 : i64} {
  func.func @_bn_add_relu_kernel(%arg0: i32, %arg1: memref<1x4x256xf32, #tpu.memory_space<vmem>>, %arg2: memref<1x4x256xf32, #tpu.memory_space<vmem>>, %arg3: memref<4x1xf32, #tpu.memory_space<vmem>>, %arg4: memref<4x1xf32, #tpu.memory_space<vmem>>, %arg5: memref<1x4x256xf32, #tpu.memory_space<vmem>>) attributes {dimension_semantics = [#tpu.dimension_semantics<parallel>], iteration_bounds = array<i64: 2>, scalar_prefetch = 0 : i64, scratch_operands = 0 : i64, tpu.core_type = #tpu.core_type<tc>, window_params = [{transform_indices = @transform_0, window_bounds = array<i64: 1, 4, 256>}, {transform_indices = @transform_1, window_bounds = array<i64: 1, 4, 256>}, {pipeline_mode = #tpu.pipeline_mode<synchronous>, transform_indices = @transform_2, window_bounds = array<i64: 4, 1>}, {pipeline_mode = #tpu.pipeline_mode<synchronous>, transform_indices = @transform_3, window_bounds = array<i64: 4, 1>}, {transform_indices = @transform_4, window_bounds = array<i64: 1, 4, 256>}]} {
    %c0 = arith.constant 0 : index
    %c0_0 = arith.constant 0 : index
    %c0_1 = arith.constant 0 : index
    %0 = vector.load %arg1[%c0, %c0_0, %c0_1] : memref<1x4x256xf32, #tpu.memory_space<vmem>>, vector<1x4x256xf32>
    %1 = vector.shape_cast %0 : vector<1x4x256xf32> to vector<4x256xf32>
    %c0_2 = arith.constant 0 : index
    %c0_3 = arith.constant 0 : index
    %c0_4 = arith.constant 0 : index
    %2 = vector.load %arg2[%c0_2, %c0_3, %c0_4] : memref<1x4x256xf32, #tpu.memory_space<vmem>>, vector<1x4x256xf32>
    %3 = vector.shape_cast %2 : vector<1x4x256xf32> to vector<4x256xf32>
    %c0_5 = arith.constant 0 : index
    %c0_6 = arith.constant 0 : index
    %4 = vector.load %arg3[%c0_5, %c0_6] : memref<4x1xf32, #tpu.memory_space<vmem>>, vector<4x1xf32>
    %5 = vector.broadcast %4 : vector<4x1xf32> to vector<4x256xf32>
    %6 = arith.mulf %1, %5 : vector<4x256xf32>
    %c0_7 = arith.constant 0 : index
    %c0_8 = arith.constant 0 : index
    %7 = vector.load %arg4[%c0_7, %c0_8] : memref<4x1xf32, #tpu.memory_space<vmem>>, vector<4x1xf32>
    %8 = vector.broadcast %7 : vector<4x1xf32> to vector<4x256xf32>
    %9 = arith.addf %6, %8 : vector<4x256xf32>
    %10 = arith.addf %9, %3 : vector<4x256xf32>
    %cst = arith.constant 0.000000e+00 : f32
    %11 = vector.broadcast %cst : f32 to vector<4x256xf32>
    %12 = arith.maximumf %10, %11 : vector<4x256xf32>
    %c0_9 = arith.constant 0 : index
    %c0_10 = arith.constant 0 : index
    %c0_11 = arith.constant 0 : index
    %13 = vector.load %arg5[%c0_9, %c0_10, %c0_11] : memref<1x4x256xf32, #tpu.memory_space<vmem>>, vector<1x4x256xf32>
    %14 = vector.shape_cast %13 : vector<1x4x256xf32> to vector<4x256xf32>
    %15 = vector.shape_cast %12 : vector<4x256xf32> to vector<1x4x256xf32>
    tpu.vector_store %arg5[%c0_9, %c0_10, %c0_11], %15 {strides = array<i32>} : memref<1x4x256xf32, #tpu.memory_space<vmem>>, vector<1x4x256xf32>,
    return
  }
  func.func @transform_0(%arg0: i32) -> (i32, i32, i32) {
    %c0_i32 = arith.constant 0 : i32
    %c0_i32_0 = arith.constant 0 : i32
    %c0_i32_1 = arith.constant 0 : i32
    return %arg0, %c0_i32, %c0_i32_0 : i32, i32, i32
  }
  func.func @transform_1(%arg0: i32) -> (i32, i32, i32) {
    %c0_i32 = arith.constant 0 : i32
    %c0_i32_0 = arith.constant 0 : i32
    %c0_i32_1 = arith.constant 0 : i32
    return %arg0, %c0_i32, %c0_i32_0 : i32, i32, i32
  }
  func.func @transform_2(%arg0: i32) -> (i32, i32) {
    %c0_i32 = arith.constant 0 : i32
    %c0_i32_0 = arith.constant 0 : i32
    %c0_i32_1 = arith.constant 0 : i32
    return %c0_i32, %c0_i32_0 : i32, i32
  }
  func.func @transform_3(%arg0: i32) -> (i32, i32) {
    %c0_i32 = arith.constant 0 : i32
    %c0_i32_0 = arith.constant 0 : i32
    %c0_i32_1 = arith.constant 0 : i32
    return %c0_i32, %c0_i32_0 : i32, i32
  }
  func.func @transform_4(%arg0: i32) -> (i32, i32, i32) {
    %c0_i32 = arith.constant 0 : i32
    %c0_i32_0 = arith.constant 0 : i32
    %c0_i32_1 = arith.constant 0 : i32
    return %arg0, %c0_i32, %c0_i32_0 : i32, i32, i32
  }
}

module attributes {stable_mosaic.version = 11 : i64} {
  func.func @_conv3x3_bn_stats_kernel(%arg0: i32, %arg1: memref<1x4x256xf32, #tpu.memory_space<vmem>>, %arg2: memref<4x36xf32, #tpu.memory_space<vmem>>, %arg3: memref<4x1xf32, #tpu.memory_space<vmem>>, %arg4: memref<4x1xf32, #tpu.memory_space<vmem>>, %arg5: memref<1x4x256xf32, #tpu.memory_space<vmem>>, %arg6: memref<1x4x1xf32, #tpu.memory_space<vmem>>, %arg7: memref<1x4x1xf32, #tpu.memory_space<vmem>>, %arg8: memref<36x256xf32, #tpu.memory_space<vmem>>) attributes {dimension_semantics = [#tpu.dimension_semantics<parallel>], iteration_bounds = array<i64: 2>, scalar_prefetch = 0 : i64, scratch_operands = 1 : i64, tpu.core_type = #tpu.core_type<tc>, window_params = [{transform_indices = @transform_0, window_bounds = array<i64: 1, 4, 256>}, {pipeline_mode = #tpu.pipeline_mode<synchronous>, transform_indices = @transform_1, window_bounds = array<i64: 4, 36>}, {pipeline_mode = #tpu.pipeline_mode<synchronous>, transform_indices = @transform_2, window_bounds = array<i64: 4, 1>}, {pipeline_mode = #tpu.pipeline_mode<synchronous>, transform_indices = @transform_3, window_bounds = array<i64: 4, 1>}, {transform_indices = @transform_4, window_bounds = array<i64: 1, 4, 256>}, {transform_indices = @transform_5, window_bounds = array<i64: 1, 4, 1>}, {transform_indices = @transform_6, window_bounds = array<i64: 1, 4, 1>}]} {
    %c0 = arith.constant 0 : index
    %c0_0 = arith.constant 0 : index
    %c0_1 = arith.constant 0 : index
    %0 = vector.load %arg1[%c0, %c0_0, %c0_1] : memref<1x4x256xf32, #tpu.memory_space<vmem>>, vector<1x4x256xf32>
    %1 = vector.shape_cast %0 : vector<1x4x256xf32> to vector<4x256xf32>
    %c0_2 = arith.constant 0 : index
    %c0_3 = arith.constant 0 : index
    %2 = vector.load %arg3[%c0_2, %c0_3] : memref<4x1xf32, #tpu.memory_space<vmem>>, vector<4x1xf32>
    %3 = vector.broadcast %2 : vector<4x1xf32> to vector<4x256xf32>
    %4 = arith.mulf %1, %3 : vector<4x256xf32>
    %c0_4 = arith.constant 0 : index
    %c0_5 = arith.constant 0 : index
    %5 = vector.load %arg4[%c0_4, %c0_5] : memref<4x1xf32, #tpu.memory_space<vmem>>, vector<4x1xf32>
    %6 = vector.broadcast %5 : vector<4x1xf32> to vector<4x256xf32>
    %7 = arith.addf %4, %6 : vector<4x256xf32>
    %cst = arith.constant 0.000000e+00 : f32
    %8 = vector.broadcast %cst : f32 to vector<4x256xf32>
    %9 = arith.maximumf %7, %8 : vector<4x256xf32>
    %10 = tpu.iota {dimensions = array<i32: 1>} : vector<1x256xi32>
    %c15_i32 = arith.constant 15 : i32
    %11 = vector.broadcast %c15_i32 : i32 to vector<1x256xi32>
    %12 = arith.andi %10, %11 : vector<1x256xi32>
    %cst_6 = arith.constant 0.000000e+00 : f32
    %13 = vector.broadcast %cst_6 : f32 to vector<36x256xf32>
    %c0_7 = arith.constant 0 : index
    %c0_8 = arith.constant 0 : index
    %14 = vector.load %arg8[%c0_7, %c0_8] : memref<36x256xf32, #tpu.memory_space<vmem>>, vector<36x256xf32>
    tpu.vector_store %arg8[%c0_7, %c0_8], %13 {strides = array<i32>} : memref<36x256xf32, #tpu.memory_space<vmem>>, vector<36x256xf32>,
    %c14_i32 = arith.constant 14 : i32
    %15 = vector.broadcast %c14_i32 : i32 to vector<1x256xi32>
    %16 = arith.cmpi sle, %12, %15 : vector<1x256xi32>
    %cst_9 = arith.constant 0.000000e+00 : f32
    %17 = vector.shape_cast %16 : vector<1x256xi1> to vector<1x256xi1>
    %18 = vector.broadcast %17 : vector<1x256xi1> to vector<4x256xi1>
    %19 = vector.broadcast %cst_9 : f32 to vector<4x256xf32>
    %20 = arith.select %18, %9, %19 : vector<4x256xi1>, vector<4x256xf32>
    %21 = vector.extract_strided_slice %20 {offsets = [0, 0], sizes = [4, 239], strides = [1, 1]} : vector<4x256xf32> to vector<4x239xf32>
    %c0_10 = arith.constant 0 : index
    %c17 = arith.constant 17 : index
    %22 = vector.load %arg8[%c0_10, %c17] : memref<36x256xf32, #tpu.memory_space<vmem>>, vector<4x239xf32>
    tpu.vector_store %arg8[%c0_10, %c17], %21 {strides = array<i32>} : memref<36x256xf32, #tpu.memory_space<vmem>>, vector<4x239xf32>,
    %23 = vector.extract_strided_slice %9 {offsets = [0, 0], sizes = [4, 240], strides = [1, 1]} : vector<4x256xf32> to vector<4x240xf32>
    %c4 = arith.constant 4 : index
    %c16 = arith.constant 16 : index
    %24 = vector.load %arg8[%c4, %c16] : memref<36x256xf32, #tpu.memory_space<vmem>>, vector<4x240xf32>
    tpu.vector_store %arg8[%c4, %c16], %23 {strides = array<i32>} : memref<36x256xf32, #tpu.memory_space<vmem>>, vector<4x240xf32>,
    %c1_i32 = arith.constant 1 : i32
    %25 = vector.broadcast %c1_i32 : i32 to vector<1x256xi32>
    %26 = arith.cmpi sge, %12, %25 : vector<1x256xi32>
    %cst_11 = arith.constant 0.000000e+00 : f32
    %27 = vector.shape_cast %26 : vector<1x256xi1> to vector<1x256xi1>
    %28 = vector.broadcast %27 : vector<1x256xi1> to vector<4x256xi1>
    %29 = vector.broadcast %cst_11 : f32 to vector<4x256xf32>
    %30 = arith.select %28, %9, %29 : vector<4x256xi1>, vector<4x256xf32>
    %31 = vector.extract_strided_slice %30 {offsets = [0, 0], sizes = [4, 241], strides = [1, 1]} : vector<4x256xf32> to vector<4x241xf32>
    %c8 = arith.constant 8 : index
    %c15 = arith.constant 15 : index
    %32 = vector.load %arg8[%c8, %c15] : memref<36x256xf32, #tpu.memory_space<vmem>>, vector<4x241xf32>
    tpu.vector_store %arg8[%c8, %c15], %31 {strides = array<i32>} : memref<36x256xf32, #tpu.memory_space<vmem>>, vector<4x241xf32>,
    %c14_i32_12 = arith.constant 14 : i32
    %33 = vector.broadcast %c14_i32_12 : i32 to vector<1x256xi32>
    %34 = arith.cmpi sle, %12, %33 : vector<1x256xi32>
    %cst_13 = arith.constant 0.000000e+00 : f32
    %35 = vector.shape_cast %34 : vector<1x256xi1> to vector<1x256xi1>
    %36 = vector.broadcast %35 : vector<1x256xi1> to vector<4x256xi1>
    %37 = vector.broadcast %cst_13 : f32 to vector<4x256xf32>
    %38 = arith.select %36, %9, %37 : vector<4x256xi1>, vector<4x256xf32>
    %39 = vector.extract_strided_slice %38 {offsets = [0, 0], sizes = [4, 255], strides = [1, 1]} : vector<4x256xf32> to vector<4x255xf32>
    %c12 = arith.constant 12 : index
    %c1 = arith.constant 1 : index
    %40 = vector.load %arg8[%c12, %c1] : memref<36x256xf32, #tpu.memory_space<vmem>>, vector<4x255xf32>
    tpu.vector_store %arg8[%c12, %c1], %39 {strides = array<i32>} : memref<36x256xf32, #tpu.memory_space<vmem>>, vector<4x255xf32>,
    %c16_14 = arith.constant 16 : index
    %c0_15 = arith.constant 0 : index
    %41 = vector.load %arg8[%c16_14, %c0_15] : memref<36x256xf32, #tpu.memory_space<vmem>>, vector<4x256xf32>
    tpu.vector_store %arg8[%c16_14, %c0_15], %9 {strides = array<i32>} : memref<36x256xf32, #tpu.memory_space<vmem>>, vector<4x256xf32>,
    %c1_i32_16 = arith.constant 1 : i32
    %42 = vector.broadcast %c1_i32_16 : i32 to vector<1x256xi32>
    %43 = arith.cmpi sge, %12, %42 : vector<1x256xi32>
    %cst_17 = arith.constant 0.000000e+00 : f32
    %44 = vector.shape_cast %43 : vector<1x256xi1> to vector<1x256xi1>
    %45 = vector.broadcast %44 : vector<1x256xi1> to vector<4x256xi1>
    %46 = vector.broadcast %cst_17 : f32 to vector<4x256xf32>
    %47 = arith.select %45, %9, %46 : vector<4x256xi1>, vector<4x256xf32>
    %48 = vector.extract_strided_slice %47 {offsets = [0, 1], sizes = [4, 255], strides = [1, 1]} : vector<4x256xf32> to vector<4x255xf32>
    %c20 = arith.constant 20 : index
    %c0_18 = arith.constant 0 : index
    %49 = vector.load %arg8[%c20, %c0_18] : memref<36x256xf32, #tpu.memory_space<vmem>>, vector<4x255xf32>
    tpu.vector_store %arg8[%c20, %c0_18], %48 {strides = array<i32>} : memref<36x256xf32, #tpu.memory_space<vmem>>, vector<4x255xf32>,
    %c14_i32_19 = arith.constant 14 : i32
    %50 = vector.broadcast %c14_i32_19 : i32 to vector<1x256xi32>
    %51 = arith.cmpi sle, %12, %50 : vector<1x256xi32>
    %cst_20 = arith.constant 0.000000e+00 : f32
    %52 = vector.shape_cast %51 : vector<1x256xi1> to vector<1x256xi1>
    %53 = vector.broadcast %52 : vector<1x256xi1> to vector<4x256xi1>
    %54 = vector.broadcast %cst_20 : f32 to vector<4x256xf32>
    %55 = arith.select %53, %9, %54 : vector<4x256xi1>, vector<4x256xf32>
    %56 = vector.extract_strided_slice %55 {offsets = [0, 15], sizes = [4, 241], strides = [1, 1]} : vector<4x256xf32> to vector<4x241xf32>
    %c24 = arith.constant 24 : index
    %c0_21 = arith.constant 0 : index
    %57 = vector.load %arg8[%c24, %c0_21] : memref<36x256xf32, #tpu.memory_space<vmem>>, vector<4x241xf32>
    tpu.vector_store %arg8[%c24, %c0_21], %56 {strides = array<i32>} : memref<36x256xf32, #tpu.memory_space<vmem>>, vector<4x241xf32>,
    %58 = vector.extract_strided_slice %9 {offsets = [0, 16], sizes = [4, 240], strides = [1, 1]} : vector<4x256xf32> to vector<4x240xf32>
    %c28 = arith.constant 28 : index
    %c0_22 = arith.constant 0 : index
    %59 = vector.load %arg8[%c28, %c0_22] : memref<36x256xf32, #tpu.memory_space<vmem>>, vector<4x240xf32>
    tpu.vector_store %arg8[%c28, %c0_22], %58 {strides = array<i32>} : memref<36x256xf32, #tpu.memory_space<vmem>>, vector<4x240xf32>,
    %c1_i32_23 = arith.constant 1 : i32
    %60 = vector.broadcast %c1_i32_23 : i32 to vector<1x256xi32>
    %61 = arith.cmpi sge, %12, %60 : vector<1x256xi32>
    %cst_24 = arith.constant 0.000000e+00 : f32
    %62 = vector.shape_cast %61 : vector<1x256xi1> to vector<1x256xi1>
    %63 = vector.broadcast %62 : vector<1x256xi1> to vector<4x256xi1>
    %64 = vector.broadcast %cst_24 : f32 to vector<4x256xf32>
    %65 = arith.select %63, %9, %64 : vector<4x256xi1>, vector<4x256xf32>
    %66 = vector.extract_strided_slice %65 {offsets = [0, 17], sizes = [4, 239], strides = [1, 1]} : vector<4x256xf32> to vector<4x239xf32>
    %c32 = arith.constant 32 : index
    %c0_25 = arith.constant 0 : index
    %67 = vector.load %arg8[%c32, %c0_25] : memref<36x256xf32, #tpu.memory_space<vmem>>, vector<4x239xf32>
    tpu.vector_store %arg8[%c32, %c0_25], %66 {strides = array<i32>} : memref<36x256xf32, #tpu.memory_space<vmem>>, vector<4x239xf32>,
    %c0_26 = arith.constant 0 : index
    %c0_27 = arith.constant 0 : index
    %68 = vector.load %arg2[%c0_26, %c0_27] : memref<4x36xf32, #tpu.memory_space<vmem>>, vector<4x36xf32>
    %c0_28 = arith.constant 0 : index
    %c0_29 = arith.constant 0 : index
    %69 = vector.load %arg8[%c0_28, %c0_29] : memref<36x256xf32, #tpu.memory_space<vmem>>, vector<36x256xf32>
    %cst_30 = arith.constant dense<0.000000e+00> : vector<4x256xf32>
    %70 = tpu.matmul %68, %69, %cst_30 {dimension_numbers = #tpu.dot_dimension_numbers<[1], [0], [0], [1], [0, 0, 1, 1], [], []>} : vector<4x36xf32>, vector<36x256xf32>, vector<4x256xf32> -> vector<4x256xf32>
    %c0_31 = arith.constant 0 : index
    %c0_32 = arith.constant 0 : index
    %c0_33 = arith.constant 0 : index
    %71 = vector.load %arg5[%c0_31, %c0_32, %c0_33] : memref<1x4x256xf32, #tpu.memory_space<vmem>>, vector<1x4x256xf32>
    %72 = vector.shape_cast %71 : vector<1x4x256xf32> to vector<4x256xf32>
    %73 = vector.shape_cast %70 : vector<4x256xf32> to vector<1x4x256xf32>
    tpu.vector_store %arg5[%c0_31, %c0_32, %c0_33], %73 {strides = array<i32>} : memref<1x4x256xf32, #tpu.memory_space<vmem>>, vector<1x4x256xf32>,
    %cst_34 = arith.constant dense<0.000000e+00> : vector<4xf32>
    %74 = vector.multi_reduction <add>, %70, %cst_34 [1] : vector<4x256xf32> to vector<4xf32>
    %75 = vector.shape_cast %74 : vector<4xf32> to vector<4x1xf32>
    %c0_35 = arith.constant 0 : index
    %c0_36 = arith.constant 0 : index
    %c0_37 = arith.constant 0 : index
    %76 = vector.load %arg6[%c0_35, %c0_36, %c0_37] : memref<1x4x1xf32, #tpu.memory_space<vmem>>, vector<1x4x1xf32>
    %77 = vector.shape_cast %76 : vector<1x4x1xf32> to vector<4x1xf32>
    %78 = vector.shape_cast %75 : vector<4x1xf32> to vector<1x4x1xf32>
    tpu.vector_store %arg6[%c0_35, %c0_36, %c0_37], %78 {strides = array<i32>} : memref<1x4x1xf32, #tpu.memory_space<vmem>>, vector<1x4x1xf32>,
    %79 = arith.mulf %70, %70 : vector<4x256xf32>
    %cst_38 = arith.constant dense<0.000000e+00> : vector<4xf32>
    %80 = vector.multi_reduction <add>, %79, %cst_38 [1] : vector<4x256xf32> to vector<4xf32>
    %81 = vector.shape_cast %80 : vector<4xf32> to vector<4x1xf32>
    %c0_39 = arith.constant 0 : index
    %c0_40 = arith.constant 0 : index
    %c0_41 = arith.constant 0 : index
    %82 = vector.load %arg7[%c0_39, %c0_40, %c0_41] : memref<1x4x1xf32, #tpu.memory_space<vmem>>, vector<1x4x1xf32>
    %83 = vector.shape_cast %82 : vector<1x4x1xf32> to vector<4x1xf32>
    %84 = vector.shape_cast %81 : vector<4x1xf32> to vector<1x4x1xf32>
    tpu.vector_store %arg7[%c0_39, %c0_40, %c0_41], %84 {strides = array<i32>} : memref<1x4x1xf32, #tpu.memory_space<vmem>>, vector<1x4x1xf32>,
    return
  }
  func.func @transform_0(%arg0: i32) -> (i32, i32, i32) {
    %c0_i32 = arith.constant 0 : i32
    %c0_i32_0 = arith.constant 0 : i32
    %c0_i32_1 = arith.constant 0 : i32
    return %arg0, %c0_i32, %c0_i32_0 : i32, i32, i32
  }
  func.func @transform_1(%arg0: i32) -> (i32, i32) {
    %c0_i32 = arith.constant 0 : i32
    %c0_i32_0 = arith.constant 0 : i32
    %c0_i32_1 = arith.constant 0 : i32
    return %c0_i32, %c0_i32_0 : i32, i32
  }
  func.func @transform_2(%arg0: i32) -> (i32, i32) {
    %c0_i32 = arith.constant 0 : i32
    %c0_i32_0 = arith.constant 0 : i32
    %c0_i32_1 = arith.constant 0 : i32
    return %c0_i32, %c0_i32_0 : i32, i32
  }
  func.func @transform_3(%arg0: i32) -> (i32, i32) {
    %c0_i32 = arith.constant 0 : i32
    %c0_i32_0 = arith.constant 0 : i32
    %c0_i32_1 = arith.constant 0 : i32
    return %c0_i32, %c0_i32_0 : i32, i32
  }
  func.func @transform_4(%arg0: i32) -> (i32, i32, i32) {
    %c0_i32 = arith.constant 0 : i32
    %c0_i32_0 = arith.constant 0 : i32
    %c0_i32_1 = arith.constant 0 : i32
    return %arg0, %c0_i32, %c0_i32_0 : i32, i32, i32
  }
  func.func @transform_5(%arg0: i32) -> (i32, i32, i32) {
    %c0_i32 = arith.constant 0 : i32
    %c0_i32_0 = arith.constant 0 : i32
    %c0_i32_1 = arith.constant 0 : i32
    return %arg0, %c0_i32, %c0_i32_0 : i32, i32, i32
  }
  func.func @transform_6(%arg0: i32) -> (i32, i32, i32) {
    %c0_i32 = arith.constant 0 : i32
    %c0_i32_0 = arith.constant 0 : i32
    %c0_i32_1 = arith.constant 0 : i32
    return %arg0, %c0_i32, %c0_i32_0 : i32, i32, i32
  }
}

</mosaic_0001>

<llo_original>
// kernel: basic_block_forward.5
$region0: #{basic_block_forward.5}
  #allocation0 [shape = 'u32[]', space=smem, size = 0x4, offset = 0x4, fixed_abs, tag = 'smem constant byte address 0x4 - core index']
  #allocation1 [shape = 'u32[144,128]{1,0:T(1,128)}', space=vmem, size = 0x12000, scoped, tag = 'internal scratch']
  %s0 = inlined_call_operand.vmem [shape: f32[2,4,256], index: 0, kind: input, shape index: {}]
  %s1 = inlined_call_operand.vmem [shape: f32[2,4,256], index: 1, kind: input, shape index: {}]
  %s2 = inlined_call_operand.vmem [shape: f32[4,1], index: 2, kind: input, shape index: {}]
  %s3 = inlined_call_operand.vmem [shape: f32[4,1], index: 3, kind: input, shape index: {}]
  %s4 = inlined_call_operand.vmem [shape: f32[2,4,256], index: 4, kind: output, shape index: {}]
  %s5 = sld [smem:[#allocation0]]
  $region49: #{basic_block_forward.5} parent=0
    _
  %s7 = ssub.s32 1, %s5
  %s8 = scalar_select 0, %s7, %s5
  loop: start=0, step=1, limit=4
  $region2: #{basic_block_forward.5} parent=0 // loop_pre_header
    _
  $region3: #{basic_block_forward.5} parent=0 // loop_header
    %s10 = sphi 0, %s14
    %p11 = scmp.ge.s32.totalorder %s10, 4
    %s20 = sphi 0, %s22
    %s23 = sphi 0, %s20
    %s24 = sphi 0, %s23
    %s40 = sphi 0, %s24
    %s46 = sphi 0, %s48
    %s49 = sphi 0, %s46
    %s50 = sphi 0, %s49
    %s66 = sphi 0, %s50
    %s70 = sphi 0, %s70
    %s72 = sphi 0, %s70
    %s73 = sphi 0, %s72
    %s87 = sphi 0, %s73
    %s91 = sphi 0, %s91
    %s93 = sphi 0, %s91
    %s94 = sphi 0, %s93
    %s108 = sphi 0, %s94
    %s114 = sphi 0, %s116
    %s117 = sphi 0, %s114
    %s118 = sphi 0, %s117
    %s134 = sphi 0, %s118
  $region4: #{basic_block_forward.5} parent=0 // loop_header_branch
    %13 = sbr.rel (%p11) target = $region8
  $region5: #{basic_block_forward.5} parent=0 // loop_body
    %s15 = ssub.s32 %s10, 1
    %s16 = ssub.s32 %s10, 2
    %s17 = sadd.s32 %s10, 1
    %s18 = ssub.s32 %s10, %s17
    %p19 = scmp.eq.s32.totalorder %s18, 0
    %s21 = sadd.s32 %s20, 1
    %s22 = scalar_select %p19, %s20, %s21
    %p25 = pneg %p19
    %p26 = scmp.eq.s32.totalorder %s10, 1
    %p27 = por %p25, %p26
    %p28 = scmp.ne.s32.totalorder %s20, %s23
    %p29 = scmp.eq.s32.totalorder %s10, 0
    %p30 = por %p28, %p29
    %p31 = scmp.ne.s32.totalorder %s20, %s23
    %p32 = scmp.eq.s32.totalorder %s15, 1
    %p33 = por %p31, %p32
    %p34 = scmp.ne.s32.totalorder %s23, %s24
    %p35 = scmp.eq.s32.totalorder %s15, 0
    %p36 = por %p34, %p35
    %p37 = scmp.ne.s32.totalorder %s23, %s24
    %p38 = scmp.eq.s32.totalorder %s16, 1
    %p39 = por %p37, %p38
    %p41 = scmp.ne.s32.totalorder %s24, %s40
    %p42 = scmp.eq.s32.totalorder %s16, 0
    %p43 = por %p41, %p42
    %s44 = ssub.s32 %s10, %s17
    %p45 = scmp.eq.s32.totalorder %s44, 0
    %s47 = sadd.s32 %s46, 1
    %s48 = scalar_select %p45, %s46, %s47
    %p51 = pneg %p45
    %p52 = scmp.eq.s32.totalorder %s10, 1
    %p53 = por %p51, %p52
    %p54 = scmp.ne.s32.totalorder %s46, %s49
    %p55 = scmp.eq.s32.totalorder %s10, 0
    %p56 = por %p54, %p55
    %p57 = scmp.ne.s32.totalorder %s46, %s49
    %p58 = scmp.eq.s32.totalorder %s15, 1
    %p59 = por %p57, %p58
    %p60 = scmp.ne.s32.totalorder %s49, %s50
    %p61 = scmp.eq.s32.totalorder %s15, 0
    %p62 = por %p60, %p61
    %p63 = scmp.ne.s32.totalorder %s49, %s50
    %p64 = scmp.eq.s32.totalorder %s16, 1
    %p65 = por %p63, %p64
    %p67 = scmp.ne.s32.totalorder %s50, %s66
    %p68 = scmp.eq.s32.totalorder %s16, 0
    %p69 = por %p67, %p68
    %s71 = sadd.s32 %s70, 1
    %p74 = scmp.eq.s32.totalorder %s10, 1
    %p75 = scmp.ne.s32.totalorder %s70, %s72
    %p76 = scmp.eq.s32.totalorder %s10, 0
    %p77 = por %p75, %p76
    %p78 = scmp.ne.s32.totalorder %s70, %s72
    %p79 = scmp.eq.s32.totalorder %s15, 1
    %p80 = por %p78, %p79
    %p81 = scmp.ne.s32.totalorder %s72, %s73
    %p82 = scmp.eq.s32.totalorder %s15, 0
    %p83 = por %p81, %p82
    %p84 = scmp.ne.s32.totalorder %s72, %s73
    %p85 = scmp.eq.s32.totalorder %s16, 1
    %p86 = por %p84, %p85
    %p88 = scmp.ne.s32.totalorder %s73, %s87
    %p89 = scmp.eq.s32.totalorder %s16, 0
    %p90 = por %p88, %p89
    %s92 = sadd.s32 %s91, 1
    %p95 = scmp.eq.s32.totalorder %s10, 1
    %p96 = scmp.ne.s32.totalorder %s91, %s93
    %p97 = scmp.eq.s32.totalorder %s10, 0
    %p98 = por %p96, %p97
    %p99 = scmp.ne.s32.totalorder %s91, %s93
    %p100 = scmp.eq.s32.totalorder %s15, 1
    %p101 = por %p99, %p100
    %p102 = scmp.ne.s32.totalorder %s93, %s94
    %p103 = scmp.eq.s32.totalorder %s15, 0
    %p104 = por %p102, %p103
    %p105 = scmp.ne.s32.totalorder %s93, %s94
    %p106 = scmp.eq.s32.totalorder %s16, 1
    %p107 = por %p105, %p106
    %p109 = scmp.ne.s32.totalorder %s94, %s108
    %p110 = scmp.eq.s32.totalorder %s16, 0
    %p111 = por %p109, %p110
    %s112 = ssub.s32 %s10, %s17
    %p113 = scmp.eq.s32.totalorder %s112, 0
    %s115 = sadd.s32 %s114, 1
    %s116 = scalar_select %p113, %s114, %s115
    %p119 = pneg %p113
    %p120 = scmp.eq.s32.totalorder %s10, 1
    %p121 = por %p119, %p120
    %p122 = scmp.ne.s32.totalorder %s114, %s117
    %p123 = scmp.eq.s32.totalorder %s10, 0
    %p124 = por %p122, %p123
    %p125 = scmp.ne.s32.totalorder %s114, %s117
    %p126 = scmp.eq.s32.totalorder %s15, 1
    %p127 = por %p125, %p126
    %p128 = scmp.ne.s32.totalorder %s117, %s118
    %p129 = scmp.eq.s32.totalorder %s15, 0
    %p130 = por %p128, %p129
    %p131 = scmp.ne.s32.totalorder %s117, %s118
    %p132 = scmp.eq.s32.totalorder %s16, 1
    %p133 = por %p131, %p132
    %p135 = scmp.ne.s32.totalorder %s118, %s134
    %p136 = scmp.eq.s32.totalorder %s16, 0
    %p137 = por %p135, %p136
    %p138 = scmp.le.s32.totalorder 1, %s10
    %p139 = scmp.lt.s32.totalorder %s10, 3
    %p140 = pnand %p138, %p139
    %p141 = pneg %p140
    // Predicated region
    $region9: #{basic_block_forward.5} parent=5 // pred_check
      _
    $region10: #{basic_block_forward.5} parent=5 // pred_check_branch
      %143 = sbr.rel (%p140) target = $region12
    $region11: #{basic_block_forward.5} parent=5 // pred_region
      %s144 = ssub.s32 %s10, 1
      // Predicated region
      $region13: #{basic_block_forward.5} parent=11 // pred_check
        %p145 = pneg %p83
      $region14: #{basic_block_forward.5} parent=11 // pred_check_branch
        %147 = sbr.rel (%p145) target = $region16
      $region15: #{basic_block_forward.5} parent=11 // pred_region
        _
      $region16: #{basic_block_forward.5} parent=11 // pred_fallthru
        _
      // Predicated region
      $region17: #{basic_block_forward.5} parent=11 // pred_check
        %p148 = pneg %p104
      $region18: #{basic_block_forward.5} parent=11 // pred_check_branch
        %150 = sbr.rel (%p148) target = $region20
      $region19: #{basic_block_forward.5} parent=11 // pred_region
        _
      $region20: #{basic_block_forward.5} parent=11 // pred_fallthru
        _
    $region12: #{basic_block_forward.5} parent=5 // pred_fallthru
      _
    %p151 = scmp.lt.s32.totalorder %s10, 2
    // Predicated region
    $region21: #{basic_block_forward.5} parent=5 // pred_check
      %p152 = pneg %p151
    $region22: #{basic_block_forward.5} parent=5 // pred_check_branch
      %154 = sbr.rel (%p152) target = $region24
    $region23: #{basic_block_forward.5} parent=5 // pred_region
      // Predicated region
      $region25: #{basic_block_forward.5} parent=23 // pred_check
        %p155 = pneg %p30
      $region26: #{basic_block_forward.5} parent=23 // pred_check_branch
        %157 = sbr.rel (%p155) target = $region28
      $region27: #{basic_block_forward.5} parent=23 // pred_region
        %p158 = scmp.lt.s32.totalorder %s10, 1
        %s159 = scalar_select %p158, %s10, 1
        %s160 = smul.addr %s159, 2
        %s161 = smul.addr %s160, 4
        %s162 = scalar_lea.vmem %s0, %s161
      $region28: #{basic_block_forward.5} parent=23 // pred_fallthru
        _
      // Predicated region
      $region29: #{basic_block_forward.5} parent=23 // pred_check
        %p163 = pneg %p56
      $region30: #{basic_block_forward.5} parent=23 // pred_check_branch
        %165 = sbr.rel (%p163) target = $region32
      $region31: #{basic_block_forward.5} parent=23 // pred_region
        %p166 = scmp.lt.s32.totalorder %s10, 1
        %s167 = scalar_select %p166, %s10, 1
        %s168 = smul.addr %s167, 2
        %s169 = smul.addr %s168, 4
        %s170 = scalar_lea.vmem %s1, %s169
      $region32: #{basic_block_forward.5} parent=23 // pred_fallthru
        _
    $region24: #{basic_block_forward.5} parent=5 // pred_fallthru
      _
    %p171 = scmp.le.s32.totalorder 1, %s10
    %p172 = scmp.lt.s32.totalorder %s10, 3
    %p173 = pnand %p171, %p172
    %p174 = pneg %p173
    // Predicated region
    $region33: #{basic_block_forward.5} parent=5 // pred_check
      _
    $region34: #{basic_block_forward.5} parent=5 // pred_check_branch
      %176 = sbr.rel (%p173) target = $region36
    $region35: #{basic_block_forward.5} parent=5 // pred_region
      %s177 = ssub.s32 %s10, 1
      %p178 = scmp.lt.s32.totalorder %s15, 1
      %s179 = scalar_select %p178, %s15, 1
      %s180 = smul.addr %s179, 2
      %s181 = smul.addr %s180, 4
      %s182 = scalar_lea.vmem %s0, %s181
      %p183 = pneg %p36
      %p184 = pneg %p33
      %p185 = scmp.lt.s32.totalorder %s15, 1
      %s186 = scalar_select %p185, %s15, 1
      %s187 = smul.addr %s186, 2
      %s188 = smul.addr %s187, 4
      %s189 = scalar_lea.vmem %s1, %s188
      %p190 = pneg %p62
      %p191 = pneg %p59
      %p192 = pneg %p83
      %p193 = pneg %p80
      %p194 = pneg %p104
      %p195 = pneg %p101
      %p196 = pneg %p130
      %p197 = pneg %p127
      %p198 = scmp.lt.s32.totalorder %s15, 1
      %s199 = scalar_select %p198, %s15, 1
      %s200 = smul.addr %s199, 2
      %s201 = smul.addr %s200, 4
      %s202 = scalar_lea.vmem %s4, %s201
      %p203 = scmp.lt.s32.totalorder %s15, 1
      %s204 = scalar_select %p203, %s15, 1
      %s205 = smul.addr %s204, 2
      %s206 = smul.addr %s205, 4
      %s207 = scalar_lea.vmem %s0, %s206
      %p208 = scmp.lt.s32.totalorder %s15, 1
      %s209 = scalar_select %p208, %s15, 1
      %s210 = smul.addr %s209, 2
      %s211 = smul.addr %s210, 4
      %s212 = scalar_lea.vmem %s1, %s211
      %p213 = scmp.lt.s32.totalorder %s15, 1
      %s214 = scalar_select %p213, %s15, 1
      %s215 = smul.addr %s214, 2
      %s216 = smul.addr %s215, 4
      %s217 = scalar_lea.vmem %s4, %s216
      %v218 = vld [vmem:[%s207] sm:$0xff]
      %v219 = vld [vmem:[%s212] sm:$0xff]
      %v220 = vld [vmem:[%s2] sm:$0xf]
      %222 = vset.pattern.permute.xlu0 0
      %223 = vperm.xlu0 %222, %v220
      %v224 = vpop.permute.xlu0 %223
      %v226 = vunpack.c.l.s4 839922192
      %v227 = vunpack.c.0.s8 %v226
      %v228 = vlaneseq
      %v229 = vshrl.u32 %v228, 7
      %v230 = vsub.s32 %v227, %v229
      %v231 = vrot.slane %v224, %v230
      %v233 = vmul.f32 %v218, %v231
      %v234 = vld [vmem:[%s3] sm:$0xf]
      %236 = vset.pattern.permute.xlu0 0
      %237 = vperm.xlu0 %236, %v234
      %v238 = vpop.permute.xlu0 %237
      %v240 = vunpack.c.l.s4 839922192
      %v241 = vunpack.c.0.s8 %v240
      %v242 = vlaneseq
      %v243 = vshrl.u32 %v242, 7
      %v244 = vsub.s32 %v241, %v243
      %v245 = vrot.slane %v238, %v244
      %v247 = vadd.f32 %v233, %v245
      %v248 = vadd.f32 %v247, %v219
      %v249 = vmax.f32 %v248, 0.0
      %250 = vst [vmem:[%s217] sm:$0xff] %v249
      %p251 = scmp.lt.s32.totalorder %s15, 1
      %s252 = scalar_select %p251, %s15, 1
      %s253 = smul.addr %s252, 2
      %s254 = smul.addr %s253, 4
      %s255 = scalar_lea.vmem %s4, %s254
      // Predicated region
      $region37: #{basic_block_forward.5} parent=35 // pred_check
        %p256 = pneg %p127
      $region38: #{basic_block_forward.5} parent=35 // pred_check_branch
        %258 = sbr.rel (%p256) target = $region40
      $region39: #{basic_block_forward.5} parent=35 // pred_region
        _
      $region40: #{basic_block_forward.5} parent=35 // pred_fallthru
        _
    $region36: #{basic_block_forward.5} parent=5 // pred_fallthru
      _
    %p259 = scmp.le.s32.totalorder 2, %s10
    // Predicated region
    $region41: #{basic_block_forward.5} parent=5 // pred_check
      %p260 = pneg %p259
    $region42: #{basic_block_forward.5} parent=5 // pred_check_branch
      %262 = sbr.rel (%p260) target = $region44
    $region43: #{basic_block_forward.5} parent=5 // pred_region
      %s263 = ssub.s32 %s10, 2
      // Predicated region
      $region45: #{basic_block_forward.5} parent=43 // pred_check
        %p264 = pneg %p133
      $region46: #{basic_block_forward.5} parent=43 // pred_check_branch
        %266 = sbr.rel (%p264) target = $region48
      $region47: #{basic_block_forward.5} parent=43 // pred_region
        %p267 = scmp.lt.s32.totalorder %s16, 1
        %s268 = scalar_select %p267, %s16, 1
        %s269 = smul.addr %s268, 2
        %s270 = smul.addr %s269, 4
        %s271 = scalar_lea.vmem %s4, %s270
      $region48: #{basic_block_forward.5} parent=43 // pred_fallthru
        _
    $region44: #{basic_block_forward.5} parent=5 // pred_fallthru
      _
  $region6: #{basic_block_forward.5} parent=0 // loop_footer
    %s14 = sadd.s32 1, %s10
  $region7: #{basic_block_forward.5} parent=0 // loop_footer_branch
    %9 = sbr.rel target = $region3
  $region8: #{basic_block_forward.5} parent=0 // loop_exit
    _

// kernel: basic_block_forward.3
$region0: #{basic_block_forward.3}
  #allocation0 [shape = 'u32[]', space=smem, size = 0x4, offset = 0x4, fixed_abs, tag = 'smem constant byte address 0x4 - core index']
  #allocation1 [shape = 'u32[144,128]{1,0:T(1,128)}', space=vmem, size = 0x12000, scoped, tag = 'internal scratch']
  #allocation2 [shape = 'f32[36,256]{1,0:T(8,128)}', space=vmem, size = 0xa000, scoped, tag = 'scratch operand']
  %s0 = inlined_call_operand.vmem [shape: f32[2,4,256], index: 0, kind: input, shape index: {}]
  %s1 = inlined_call_operand.vmem [shape: f32[4,36], index: 1, kind: input, shape index: {}]
  %s2 = inlined_call_operand.vmem [shape: f32[4,1], index: 2, kind: input, shape index: {}]
  %s3 = inlined_call_operand.vmem [shape: f32[4,1], index: 3, kind: input, shape index: {}]
  %s4 = inlined_call_operand.vmem [shape: f32[2,4,256], index: 4, kind: output, shape index: {0}]
  %s5 = inlined_call_operand.vmem [shape: f32[2,4,1], index: 5, kind: output, shape index: {1}]
  %s6 = inlined_call_operand.vmem [shape: f32[2,4,1], index: 6, kind: output, shape index: {2}]
  %7 = xla_tuple %s4, %s5, %s6
  %s8 = sld [smem:[#allocation0]]
  $region65: #{basic_block_forward.3} parent=0
    _
  %s10 = ssub.s32 1, %s8
  %s11 = scalar_select 0, %s10, %s8
  loop: start=0, step=1, limit=4
  $region2: #{basic_block_forward.3} parent=0 // loop_pre_header
    _
  $region3: #{basic_block_forward.3} parent=0 // loop_header
    %s13 = sphi 0, %s17
    %p14 = scmp.ge.s32.totalorder %s13, 4
    %s23 = sphi 0, %s25
    %s26 = sphi 0, %s23
    %s27 = sphi 0, %s26
    %s43 = sphi 0, %s27
    %s47 = sphi 0, %s47
    %s49 = sphi 0, %s47
    %s50 = sphi 0, %s49
    %s64 = sphi 0, %s50
    %s68 = sphi 0, %s68
    %s70 = sphi 0, %s68
    %s71 = sphi 0, %s70
    %s85 = sphi 0, %s71
    %s89 = sphi 0, %s89
    %s91 = sphi 0, %s89
    %s92 = sphi 0, %s91
    %s106 = sphi 0, %s92
    %s112 = sphi 0, %s114
    %s115 = sphi 0, %s112
    %s116 = sphi 0, %s115
    %s132 = sphi 0, %s116
    %s138 = sphi 0, %s140
    %s141 = sphi 0, %s138
    %s142 = sphi 0, %s141
    %s158 = sphi 0, %s142
    %s164 = sphi 0, %s166
    %s167 = sphi 0, %s164
    %s168 = sphi 0, %s167
    %s184 = sphi 0, %s168
  $region4: #{basic_block_forward.3} parent=0 // loop_header_branch
    %16 = sbr.rel (%p14) target = $region8
  $region5: #{basic_block_forward.3} parent=0 // loop_body
    %s18 = ssub.s32 %s13, 1
    %s19 = ssub.s32 %s13, 2
    %s20 = sadd.s32 %s13, 1
    %s21 = ssub.s32 %s13, %s20
    %p22 = scmp.eq.s32.totalorder %s21, 0
    %s24 = sadd.s32 %s23, 1
    %s25 = scalar_select %p22, %s23, %s24
    %p28 = pneg %p22
    %p29 = scmp.eq.s32.totalorder %s13, 1
    %p30 = por %p28, %p29
    %p31 = scmp.ne.s32.totalorder %s23, %s26
    %p32 = scmp.eq.s32.totalorder %s13, 0
    %p33 = por %p31, %p32
    %p34 = scmp.ne.s32.totalorder %s23, %s26
    %p35 = scmp.eq.s32.totalorder %s18, 1
    %p36 = por %p34, %p35
    %p37 = scmp.ne.s32.totalorder %s26, %s27
    %p38 = scmp.eq.s32.totalorder %s18, 0
    %p39 = por %p37, %p38
    %p40 = scmp.ne.s32.totalorder %s26, %s27
    %p41 = scmp.eq.s32.totalorder %s19, 1
    %p42 = por %p40, %p41
    %p44 = scmp.ne.s32.totalorder %s27, %s43
    %p45 = scmp.eq.s32.totalorder %s19, 0
    %p46 = por %p44, %p45
    %s48 = sadd.s32 %s47, 1
    %p51 = scmp.eq.s32.totalorder %s13, 1
    %p52 = scmp.ne.s32.totalorder %s47, %s49
    %p53 = scmp.eq.s32.totalorder %s13, 0
    %p54 = por %p52, %p53
    %p55 = scmp.ne.s32.totalorder %s47, %s49
    %p56 = scmp.eq.s32.totalorder %s18, 1
    %p57 = por %p55, %p56
    %p58 = scmp.ne.s32.totalorder %s49, %s50
    %p59 = scmp.eq.s32.totalorder %s18, 0
    %p60 = por %p58, %p59
    %p61 = scmp.ne.s32.totalorder %s49, %s50
    %p62 = scmp.eq.s32.totalorder %s19, 1
    %p63 = por %p61, %p62
    %p65 = scmp.ne.s32.totalorder %s50, %s64
    %p66 = scmp.eq.s32.totalorder %s19, 0
    %p67 = por %p65, %p66
    %s69 = sadd.s32 %s68, 1
    %p72 = scmp.eq.s32.totalorder %s13, 1
    %p73 = scmp.ne.s32.totalorder %s68, %s70
    %p74 = scmp.eq.s32.totalorder %s13, 0
    %p75 = por %p73, %p74
    %p76 = scmp.ne.s32.totalorder %s68, %s70
    %p77 = scmp.eq.s32.totalorder %s18, 1
    %p78 = por %p76, %p77
    %p79 = scmp.ne.s32.totalorder %s70, %s71
    %p80 = scmp.eq.s32.totalorder %s18, 0
    %p81 = por %p79, %p80
    %p82 = scmp.ne.s32.totalorder %s70, %s71
    %p83 = scmp.eq.s32.totalorder %s19, 1
    %p84 = por %p82, %p83
    %p86 = scmp.ne.s32.totalorder %s71, %s85
    %p87 = scmp.eq.s32.totalorder %s19, 0
    %p88 = por %p86, %p87
    %s90 = sadd.s32 %s89, 1
    %p93 = scmp.eq.s32.totalorder %s13, 1
    %p94 = scmp.ne.s32.totalorder %s89, %s91
    %p95 = scmp.eq.s32.totalorder %s13, 0
    %p96 = por %p94, %p95
    %p97 = scmp.ne.s32.totalorder %s89, %s91
    %p98 = scmp.eq.s32.totalorder %s18, 1
    %p99 = por %p97, %p98
    %p100 = scmp.ne.s32.totalorder %s91, %s92
    %p101 = scmp.eq.s32.totalorder %s18, 0
    %p102 = por %p100, %p101
    %p103 = scmp.ne.s32.totalorder %s91, %s92
    %p104 = scmp.eq.s32.totalorder %s19, 1
    %p105 = por %p103, %p104
    %p107 = scmp.ne.s32.totalorder %s92, %s106
    %p108 = scmp.eq.s32.totalorder %s19, 0
    %p109 = por %p107, %p108
    %s110 = ssub.s32 %s13, %s20
    %p111 = scmp.eq.s32.totalorder %s110, 0
    %s113 = sadd.s32 %s112, 1
    %s114 = scalar_select %p111, %s112, %s113
    %p117 = pneg %p111
    %p118 = scmp.eq.s32.totalorder %s13, 1
    %p119 = por %p117, %p118
    %p120 = scmp.ne.s32.totalorder %s112, %s115
    %p121 = scmp.eq.s32.totalorder %s13, 0
    %p122 = por %p120, %p121
    %p123 = scmp.ne.s32.totalorder %s112, %s115
    %p124 = scmp.eq.s32.totalorder %s18, 1
    %p125 = por %p123, %p124
    %p126 = scmp.ne.s32.totalorder %s115, %s116
    %p127 = scmp.eq.s32.totalorder %s18, 0
    %p128 = por %p126, %p127
    %p129 = scmp.ne.s32.totalorder %s115, %s116
    %p130 = scmp.eq.s32.totalorder %s19, 1
    %p131 = por %p129, %p130
    %p133 = scmp.ne.s32.totalorder %s116, %s132
    %p134 = scmp.eq.s32.totalorder %s19, 0
    %p135 = por %p133, %p134
    %s136 = ssub.s32 %s13, %s20
    %p137 = scmp.eq.s32.totalorder %s136, 0
    %s139 = sadd.s32 %s138, 1
    %s140 = scalar_select %p137, %s138, %s139
    %p143 = pneg %p137
    %p144 = scmp.eq.s32.totalorder %s13, 1
    %p145 = por %p143, %p144
    %p146 = scmp.ne.s32.totalorder %s138, %s141
    %p147 = scmp.eq.s32.totalorder %s13, 0
    %p148 = por %p146, %p147
    %p149 = scmp.ne.s32.totalorder %s138, %s141
    %p150 = scmp.eq.s32.totalorder %s18, 1
    %p151 = por %p149, %p150
    %p152 = scmp.ne.s32.totalorder %s141, %s142
    %p153 = scmp.eq.s32.totalorder %s18, 0
    %p154 = por %p152, %p153
    %p155 = scmp.ne.s32.totalorder %s141, %s142
    %p156 = scmp.eq.s32.totalorder %s19, 1
    %p157 = por %p155, %p156
    %p159 = scmp.ne.s32.totalorder %s142, %s158
    %p160 = scmp.eq.s32.totalorder %s19, 0
    %p161 = por %p159, %p160
    %s162 = ssub.s32 %s13, %s20
    %p163 = scmp.eq.s32.totalorder %s162, 0
    %s165 = sadd.s32 %s164, 1
    %s166 = scalar_select %p163, %s164, %s165
    %p169 = pneg %p163
    %p170 = scmp.eq.s32.totalorder %s13, 1
    %p171 = por %p169, %p170
    %p172 = scmp.ne.s32.totalorder %s164, %s167
    %p173 = scmp.eq.s32.totalorder %s13, 0
    %p174 = por %p172, %p173
    %p175 = scmp.ne.s32.totalorder %s164, %s167
    %p176 = scmp.eq.s32.totalorder %s18, 1
    %p177 = por %p175, %p176
    %p178 = scmp.ne.s32.totalorder %s167, %s168
    %p179 = scmp.eq.s32.totalorder %s18, 0
    %p180 = por %p178, %p179
    %p181 = scmp.ne.s32.totalorder %s167, %s168
    %p182 = scmp.eq.s32.totalorder %s19, 1
    %p183 = por %p181, %p182
    %p185 = scmp.ne.s32.totalorder %s168, %s184
    %p186 = scmp.eq.s32.totalorder %s19, 0
    %p187 = por %p185, %p186
    %p188 = scmp.le.s32.totalorder 1, %s13
    %p189 = scmp.lt.s32.totalorder %s13, 3
    %p190 = pnand %p188, %p189
    %p191 = pneg %p190
    // Predicated region
    $region9: #{basic_block_forward.3} parent=5 // pred_check
      _
    $region10: #{basic_block_forward.3} parent=5 // pred_check_branch
      %193 = sbr.rel (%p190) target = $region12
    $region11: #{basic_block_forward.3} parent=5 // pred_region
      %s194 = ssub.s32 %s13, 1
      // Predicated region
      $region13: #{basic_block_forward.3} parent=11 // pred_check
        %p195 = pneg %p60
      $region14: #{basic_block_forward.3} parent=11 // pred_check_branch
        %197 = sbr.rel (%p195) target = $region16
      $region15: #{basic_block_forward.3} parent=11 // pred_region
        _
      $region16: #{basic_block_forward.3} parent=11 // pred_fallthru
        _
      // Predicated region
      $region17: #{basic_block_forward.3} parent=11 // pred_check
        %p198 = pneg %p81
      $region18: #{basic_block_forward.3} parent=11 // pred_check_branch
        %200 = sbr.rel (%p198) target = $region20
      $region19: #{basic_block_forward.3} parent=11 // pred_region
        _
      $region20: #{basic_block_forward.3} parent=11 // pred_fallthru
        _
      // Predicated region
      $region21: #{basic_block_forward.3} parent=11 // pred_check
        %p201 = pneg %p102
      $region22: #{basic_block_forward.3} parent=11 // pred_check_branch
        %203 = sbr.rel (%p201) target = $region24
      $region23: #{basic_block_forward.3} parent=11 // pred_region
        _
      $region24: #{basic_block_forward.3} parent=11 // pred_fallthru
        _
    $region12: #{basic_block_forward.3} parent=5 // pred_fallthru
      _
    %p204 = scmp.lt.s32.totalorder %s13, 2
    // Predicated region
    $region25: #{basic_block_forward.3} parent=5 // pred_check
      %p205 = pneg %p204
    $region26: #{basic_block_forward.3} parent=5 // pred_check_branch
      %207 = sbr.rel (%p205) target = $region28
    $region27: #{basic_block_forward.3} parent=5 // pred_region
      // Predicated region
      $region29: #{basic_block_forward.3} parent=27 // pred_check
        %p208 = pneg %p33
      $region30: #{basic_block_forward.3} parent=27 // pred_check_branch
        %210 = sbr.rel (%p208) target = $region32
      $region31: #{basic_block_forward.3} parent=27 // pred_region
        %p211 = scmp.lt.s32.totalorder %s13, 1
        %s212 = scalar_select %p211, %s13, 1
        %s213 = smul.addr %s212, 2
        %s214 = smul.addr %s213, 4
        %s215 = scalar_lea.vmem %s0, %s214
      $region32: #{basic_block_forward.3} parent=27 // pred_fallthru
        _
    $region28: #{basic_block_forward.3} parent=5 // pred_fallthru
      _
    %p216 = scmp.le.s32.totalorder 1, %s13
    %p217 = scmp.lt.s32.totalorder %s13, 3
    %p218 = pnand %p216, %p217
    %p219 = pneg %p218
    // Predicated region
    $region33: #{basic_block_forward.3} parent=5 // pred_check
      _
    $region34: #{basic_block_forward.3} parent=5 // pred_check_branch
      %221 = sbr.rel (%p218) target = $region36
    $region35: #{basic_block_forward.3} parent=5 // pred_region
      %s222 = ssub.s32 %s13, 1
      %p223 = scmp.lt.s32.totalorder %s18, 1
      %s224 = scalar_select %p223, %s18, 1
      %s225 = smul.addr %s224, 2
      %s226 = smul.addr %s225, 4
      %s227 = scalar_lea.vmem %s0, %s226
      %p228 = pneg %p39
      %p229 = pneg %p36
      %p230 = pneg %p60
      %p231 = pneg %p57
      %p232 = pneg %p81
      %p233 = pneg %p78
      %p234 = pneg %p102
      %p235 = pneg %p99
      %p236 = pneg %p128
      %p237 = pneg %p125
      %p238 = scmp.lt.s32.totalorder %s18, 1
      %s239 = scalar_select %p238, %s18, 1
      %s240 = smul.addr %s239, 2
      %s241 = smul.addr %s240, 4
      %s242 = scalar_lea.vmem %s4, %s241
      %p243 = pneg %p154
      %p244 = pneg %p151
      %p245 = scmp.lt.s32.totalorder %s18, 1
      %s246 = scalar_select %p245, %s18, 1
      %s247 = smul.addr %s246, 4
      %s248 = scalar_lea.vmem %s5, %s247
      %p249 = pneg %p180
      %p250 = pneg %p177
      %p251 = scmp.lt.s32.totalorder %s18, 1
      %s252 = scalar_select %p251, %s18, 1
      %s253 = smul.addr %s252, 4
      %s254 = scalar_lea.vmem %s6, %s253
      %p255 = scmp.lt.s32.totalorder %s18, 1
      %s256 = scalar_select %p255, %s18, 1
      %s257 = smul.addr %s256, 2
      %s258 = smul.addr %s257, 4
      %s259 = scalar_lea.vmem %s0, %s258
      %p260 = scmp.lt.s32.totalorder %s18, 1
      %s261 = scalar_select %p260, %s18, 1
      %s262 = smul.addr %s261, 2
      %s263 = smul.addr %s262, 4
      %s264 = scalar_lea.vmem %s4, %s263
      %p265 = scmp.lt.s32.totalorder %s18, 1
      %s266 = scalar_select %p265, %s18, 1
      %s267 = smul.addr %s266, 4
      %s268 = scalar_lea.vmem %s5, %s267
      %p269 = scmp.lt.s32.totalorder %s18, 1
      %s270 = scalar_select %p269, %s18, 1
      %s271 = smul.addr %s270, 4
      %s272 = scalar_lea.vmem %s6, %s271
      %v273 = vld [vmem:[%s259] sm:$0xff]
      %v274 = vlaneseq
      %v275 = vand.u32 %v274, 127
      %v276 = vadd.s32 %v275, 128
      %v277 = vand.u32 %v275, 15
      %v278 = vand.u32 %v276, 15
      %279 = vst [vmem:[#allocation2] sm:$0xff] 0.0
      %280 = vst [vmem:[#allocation2 + $0x8] sm:$0xff] 0.0
      %281 = vst [vmem:[#allocation2 + $0x10] sm:$0xff] 0.0
      %282 = vst [vmem:[#allocation2 + $0x18] sm:$0xff] 0.0
      %283 = vst [vmem:[#allocation2 + $0x20] sm:$0xff] 0.0
      %284 = vst [vmem:[#allocation2 + $0x28] sm:$0xff] 0.0
      %285 = vst [vmem:[#allocation2 + $0x30] sm:$0xff] 0.0
      %286 = vst [vmem:[#allocation2 + $0x38] sm:$0xff] 0.0
      %287 = vst [vmem:[#allocation2 + $0x40] sm:$0xf] 0.0
      %288 = vst [vmem:[#allocation2 + $0x48] sm:$0xf] 0.0
      %vm289 = vcmp.le.s32.totalorder %v277, 14
      %vm290 = vcmp.le.s32.totalorder %v278, 14
      %v291 = vsel %vm289, 1, 0
      %v292 = vsel %vm290, 1, 0
      %vm293 = vcmp.eq.s32.totalorder %v291, 1
      %vm294 = vcmp.eq.s32.totalorder %v292, 1
      %v296 = vcombine.high %v273, %v273
      %v298 = vsel %vm293, %v273, 0.0
      %v299 = vsel %vm294, %v296, 0.0
      %302 = vrot.lane.b32.xlu0 %v298, 17
      %v303 = vpop.permute.xlu0 %302
      %304 = vrot.lane.b32.xlu0 %v299, 17
      %v305 = vpop.permute.xlu0 %304
      %vm306 = vcmask 138240
      %v307 = vsel %vm306, %v303, %v305
      %vm310 = vcmask 1043592
      %311 = vst.msk [vmem:[#allocation2] sm:$0xf] %vm310, %v303
      %312 = vst [vmem:[#allocation2 + $0x8] sm:$0xf] %v307
      %v313 = vcombine.low %v273, %v273
      %314 = vrot.lane.b32.xlu0 %v313, 16
      %v315 = vpop.permute.xlu0 %314
      %316 = vrot.lane.b32.xlu0 %v273, 16
      %v317 = vpop.permute.xlu0 %316
      %vm318 = vcmask 130048
      %v319 = vsel %vm318, %v315, %v317
      %vm322 = vcmask 1047684
      %323 = vst.msk [vmem:[#allocation2] sm:$0xf0] %vm322, %v315
      %324 = vst [vmem:[#allocation2 + $0x8] sm:$0xf0] %v319
      %vm325 = vcmp.ge.s32.totalorder %v277, 1
      %vm326 = vcmp.ge.s32.totalorder %v278, 1
      %v327 = vsel %vm325, 1, 0
      %v328 = vsel %vm326, 1, 0
      %vm329 = vcmp.eq.s32.totalorder %v327, 1
      %vm330 = vcmp.eq.s32.totalorder %v328, 1
      %v331 = vsel %vm329, %v273, 0.0
      %v332 = vsel %vm330, %v296, 0.0
      %335 = vrot.lane.b32.xlu0 %v331, 15
      %v336 = vpop.permute.xlu0 %335
      %337 = vrot.lane.b32.xlu0 %v332, 15
      %v338 = vpop.permute.xlu0 %337
      %vm339 = vcmask 121856
      %v340 = vsel %vm339, %v336, %v338
      %vm343 = vcmask 1043576
      %344 = vst.msk [vmem:[#allocation2 + $0x10] sm:$0xf] %vm343, %v336
      %345 = vst [vmem:[#allocation2 + $0x18] sm:$0xf] %v340
      %v346 = vrot.slane %v298, 4
      %v347 = vrot.slane %v299, 4
      %348 = vrot.lane.b32.xlu0 %v346, 1
      %v349 = vpop.permute.xlu0 %348
      %350 = vrot.lane.b32.xlu0 %v347, 1
      %v351 = vpop.permute.xlu0 %350
      %vm352 = vcmask 7168
      %v353 = vsel %vm352, %v349, %v351
      %vm356 = vcmask 1047564
      %357 = vst.msk [vmem:[#allocation2 + $0x10] sm:$0xf0] %vm356, %v349
      %358 = vst [vmem:[#allocation2 + $0x18] sm:$0xf0] %v353
      %359 = vst [vmem:[#allocation2 + $0x20] sm:$0xf] %v273
      %360 = vst [vmem:[#allocation2 + $0x28] sm:$0xf] %v296
      %v361 = vrot.slane %v331, 4
      %v362 = vrot.slane %v332, 4
      %363 = vrot.lane.b32.xlu0 %v361, 127
      %v364 = vpop.permute.xlu0 %363
      %365 = vrot.lane.b32.xlu0 %v362, 127
      %v366 = vpop.permute.xlu0 %365
      %vm367 = vcmask 1039360
      %v368 = vsel %vm367, %v364, %v366
      %371 = vst [vmem:[#allocation2 + $0x20] sm:$0xf0] %v368
      %vm372 = vcmask 1039364
      %373 = vst.msk [vmem:[#allocation2 + $0x28] sm:$0xf0] %vm372, %v366
      %374 = vrot.lane.b32.xlu0 %v298, 113
      %v375 = vpop.permute.xlu0 %374
      %376 = vrot.lane.b32.xlu0 %v299, 113
      %v377 = vpop.permute.xlu0 %376
      %vm378 = vcmask 924672
      %v379 = vsel %vm378, %v375, %v377
      %382 = vst [vmem:[#allocation2 + $0x30] sm:$0xf] %v379
      %vm383 = vcmask 920576
      %384 = vst.msk [vmem:[#allocation2 + $0x38] sm:$0xf] %vm383, %v377
      %385 = vrot.lane.b32.xlu0 %v313, 112
      %v386 = vpop.permute.xlu0 %385
      %387 = vrot.lane.b32.xlu0 %v273, 112
      %v388 = vpop.permute.xlu0 %387
      %vm389 = vcmask 916480
      %v390 = vsel %vm389, %v386, %v388
      %393 = vst [vmem:[#allocation2 + $0x30] sm:$0xf0] %v390
      %vm394 = vcmask 916484
      %395 = vst.msk [vmem:[#allocation2 + $0x38] sm:$0xf0] %vm394, %v388
      %396 = vrot.lane.b32.xlu0 %v331, 111
      %v397 = vpop.permute.xlu0 %396
      %398 = vrot.lane.b32.xlu0 %v332, 111
      %v399 = vpop.permute.xlu0 %398
      %vm400 = vcmask 908288
      %v401 = vsel %vm400, %v397, %v399
      %404 = vst [vmem:[#allocation2 + $0x40] sm:$0xf] %v401
      %vm405 = vcmask 904192
      %406 = vst.msk [vmem:[#allocation2 + $0x48] sm:$0xf] %vm405, %v399
      %v407 = vld [vmem:[%s1] sm:$0xf]
      %v408 = vld [vmem:[#allocation2] sm:$0xff]
      %v409 = vld [vmem:[#allocation2 + $0x8] sm:$0xff]
      %v410 = vld [vmem:[#allocation2 + $0x10] sm:$0xff]
      %v411 = vld [vmem:[#allocation2 + $0x18] sm:$0xff]
      %v412 = vld [vmem:[#allocation2 + $0x20] sm:$0xff]
      %v413 = vld [vmem:[#allocation2 + $0x28] sm:$0xff]
      %v414 = vld [vmem:[#allocation2 + $0x30] sm:$0xff]
      %v415 = vld [vmem:[#allocation2 + $0x38] sm:$0xff]
      %v416 = vld [vmem:[#allocation2 + $0x40] sm:$0xf]
      %v417 = vld [vmem:[#allocation2 + $0x48] sm:$0xf]
      %vm418 = vcmask 293888
      %v420 = vsel %vm418, %v407, 0
      %vm422 = vcmask 1043456
      %v424 = vsel %vm422, %v416, 0
      %v427 = vsel %vm422, %v417, 0
      %429 = vmatprep.subr.mxu0 %v409
      %430 = vmatpush1.msra.mxu0 %v408
      %431 = vmatprep.subr.mxu0 %v411
      %432 = vmatpush1.msra.mxu0 %v410
      %433 = vmatprep.subr.mxu0 %v413
      %434 = vmatpush1.msra.mxu0 %v412
      %435 = vmatprep.subr.mxu0 %v415
      %436 = vmatpush1.msra.mxu0 %v414
      %437 = vmatprep.subr.mxu0 %v427
      %438 = vmatpush1.msra.mxu0 %v424
      %439 = vmatprep.subr.mxu0 0.0
      %440 = vmatpush1.msra.mxu0 0.0
      %441 = vmatprep.subr.mxu0 0.0
      %442 = vmatpush1.msra.mxu0 0.0
      %443 = vmatprep.subr.mxu0 0.0
      %444 = vmatpush1.msra.mxu0 0.0
      %445 = vmatprep.subr.mxu0 0.0
      %446 = vmatpush1.msra.mxu0 0.0
      %447 = vmatprep.subr.mxu0 0.0
      %448 = vmatpush1.msra.mxu0 0.0
      %449 = vmatprep.subr.mxu0 0.0
      %450 = vmatpush1.msra.mxu0 0.0
      %451 = vmatprep.subr.mxu0 0.0
      %452 = vmatpush1.msra.mxu0 0.0
      %453 = vmatprep.subr.mxu0 0.0
      %454 = vmatpush1.msra.mxu0 0.0
      %455 = vmatprep.subr.mxu0 0.0
      %456 = vmatpush1.msra.mxu0 0.0
      %457 = vmatprep.subr.mxu0 0.0
      %458 = vmatpush1.msra.mxu0 0.0
      %459 = vmatprep.subr.mxu0 0.0
      %460 = vmatpush1.msra.mxu0 0.0
      %461 = vmatprep.subr.mxu0 0.0
      %462 = vmatpush1.msra.mxu0 0.0
      %463 = vmatprep.subr.mxu0 0.0
      %464 = vmatpush1.msra.mxu0 0.0
      %465 = vmatprep.subr.mxu0 0.0
      %466 = vmatpush1.msra.mxu0 0.0
      %467 = vmatprep.subr.mxu0 0.0
      %468 = vmatpush1.msra.mxu0 0.0
      %469 = vmatprep.subr.mxu0 0.0
      %470 = vmatpush1.msra.mxu0 0.0
      %471 = vmatprep.subr.mxu0 0.0
      %472 = vmatpush1.msra.mxu0 0.0
      %473 = vmatprep.subr.mxu0 0.0
      %474 = vmatpush1.msra.mxu0 0.0
      %475 = vmatprep.subr.mxu0 0.0
      %476 = vmatpush1.msra.mxu0 0.0
      %477 = vmatprep.subr.mxu0 0.0
      %478 = vmatpush1.msra.mxu0 0.0
      %479 = vmatprep.subr.mxu0 0.0
      %480 = vmatpush1.msra.mxu0 0.0
      %481 = vmatprep.subr.mxu0 0.0
      %482 = vmatpush1.msra.mxu0 0.0
      %483 = vmatprep.subr.mxu0 0.0
      %484 = vmatpush1.msra.mxu0 0.0
      %485 = vmatprep.subr.mxu0 0.0
      %486 = vmatpush1.msra.mxu0 0.0
      %487 = vmatprep.subr.mxu0 0.0
      %488 = vmatpush1.msra.mxu0 0.0
      %489 = vmatprep.subr.mxu0 0.0
      %490 = vmatpush1.msra.mxu0 0.0
      %491 = vmatprep.subr.mxu0 0.0
      %492 = vmatpush1.msra.mxu0 0.0
      %493 = vmatprep.mubr.f32.mxu0 0.0
      %494 = vmatmul.mubr.f32.gmra.mrb[0].mxu0 %v420
      %v495 = vpop.f32.mrb[0].mxu0
      %v496 = vadd.f32 0.0, %v495
      %v497 = vpop.f32.mrb[0].mxu0
      %v498 = vadd.f32 0.0, %v497
      %499 = vdwg.mxu0
      %v502 = vcombine.low %v496, %v498
      %504 = vst [vmem:[%s264] sm:$0xff] %v502
      %v505 = vsel %vm422, %v496, 0.0
      %v506 = vsel %vm422, %v498, 0.0
      %v507 = vadd.f32 %v505, %v506
      %508 = vadd.xlane.f32.xlu0 %v507
      %v509 = vpop.xlane.xlu0 %508
      %vm510 = vcmask 3072
      %511 = vst.msk [vmem:[%s268] sm:$0xf] %vm510, %v509
      %v512 = vmul.f32 %v496, %v496
      %v513 = vmul.f32 %v498, %v498
      %v514 = vsel %vm422, %v512, 0.0
      %v515 = vsel %vm422, %v513, 0.0
      %v516 = vadd.f32 %v514, %v515
      %517 = vadd.xlane.f32.xlu0 %v516
      %v518 = vpop.xlane.xlu0 %517
      %519 = vst.msk [vmem:[%s272] sm:$0xf] %vm510, %v518
      %p520 = scmp.lt.s32.totalorder %s18, 1
      %s521 = scalar_select %p520, %s18, 1
      %s522 = smul.addr %s521, 2
      %s523 = smul.addr %s522, 4
      %s524 = scalar_lea.vmem %s4, %s523
      %p525 = scmp.lt.s32.totalorder %s18, 1
      %s526 = scalar_select %p525, %s18, 1
      %s527 = smul.addr %s526, 4
      %s528 = scalar_lea.vmem %s5, %s527
      %p529 = scmp.lt.s32.totalorder %s18, 1
      %s530 = scalar_select %p529, %s18, 1
      %s531 = smul.addr %s530, 4
      %s532 = scalar_lea.vmem %s6, %s531
      // Predicated region
      $region37: #{basic_block_forward.3} parent=35 // pred_check
        %p533 = pneg %p125
      $region38: #{basic_block_forward.3} parent=35 // pred_check_branch
        %535 = sbr.rel (%p533) target = $region40
      $region39: #{basic_block_forward.3} parent=35 // pred_region
        _
      $region40: #{basic_block_forward.3} parent=35 // pred_fallthru
        _
      // Predicated region
      $region41: #{basic_block_forward.3} parent=35 // pred_check
        %p536 = pneg %p151
      $region42: #{basic_block_forward.3} parent=35 // pred_check_branch
        %538 = sbr.rel (%p536) target = $region44
      $region43: #{basic_block_forward.3} parent=35 // pred_region
        _
      $region44: #{basic_block_forward.3} parent=35 // pred_fallthru
        _
      // Predicated region
      $region45: #{basic_block_forward.3} parent=35 // pred_check
        %p539 = pneg %p177
      $region46: #{basic_block_forward.3} parent=35 // pred_check_branch
        %541 = sbr.rel (%p539) target = $region48
      $region47: #{basic_block_forward.3} parent=35 // pred_region
        _
      $region48: #{basic_block_forward.3} parent=35 // pred_fallthru
        _
    $region36: #{basic_block_forward.3} parent=5 // pred_fallthru
      _
    %p542 = scmp.le.s32.totalorder 2, %s13
    // Predicated region
    $region49: #{basic_block_forward.3} parent=5 // pred_check
      %p543 = pneg %p542
    $region50: #{basic_block_forward.3} parent=5 // pred_check_branch
      %545 = sbr.rel (%p543) target = $region52
    $region51: #{basic_block_forward.3} parent=5 // pred_region
      %s546 = ssub.s32 %s13, 2
      // Predicated region
      $region53: #{basic_block_forward.3} parent=51 // pred_check
        %p547 = pneg %p131
      $region54: #{basic_block_forward.3} parent=51 // pred_check_branch
        %549 = sbr.rel (%p547) target = $region56
      $region55: #{basic_block_forward.3} parent=51 // pred_region
        %p550 = scmp.lt.s32.totalorder %s19, 1
        %s551 = scalar_select %p550, %s19, 1
        %s552 = smul.addr %s551, 2
        %s553 = smul.addr %s552, 4
        %s554 = scalar_lea.vmem %s4, %s553
      $region56: #{basic_block_forward.3} parent=51 // pred_fallthru
        _
      // Predicated region
      $region57: #{basic_block_forward.3} parent=51 // pred_check
        %p555 = pneg %p157
      $region58: #{basic_block_forward.3} parent=51 // pred_check_branch
        %557 = sbr.rel (%p555) target = $region60
      $region59: #{basic_block_forward.3} parent=51 // pred_region
        %p558 = scmp.lt.s32.totalorder %s19, 1
        %s559 = scalar_select %p558, %s19, 1
        %s560 = smul.addr %s559, 4
        %s561 = scalar_lea.vmem %s5, %s560
      $region60: #{basic_block_forward.3} parent=51 // pred_fallthru
        _
      // Predicated region
      $region61: #{basic_block_forward.3} parent=51 // pred_check
        %p562 = pneg %p183
      $region62: #{basic_block_forward.3} parent=51 // pred_check_branch
        %564 = sbr.rel (%p562) target = $region64
      $region63: #{basic_block_forward.3} parent=51 // pred_region
        %p565 = scmp.lt.s32.totalorder %s19, 1
        %s566 = scalar_select %p565, %s19, 1
        %s567 = smul.addr %s566, 4
        %s568 = scalar_lea.vmem %s6, %s567
      $region64: #{basic_block_forward.3} parent=51 // pred_fallthru
        _
    $region52: #{basic_block_forward.3} parent=5 // pred_fallthru
      _
  $region6: #{basic_block_forward.3} parent=0 // loop_footer
    %s17 = sadd.s32 1, %s13
  $region7: #{basic_block_forward.3} parent=0 // loop_footer_branch
    %12 = sbr.rel target = $region3
  $region8: #{basic_block_forward.3} parent=0 // loop_exit
    _

// kernel: basic_block_forward.4
$region0: #{basic_block_forward.4}
  #allocation0 [shape = 'u32[]', space=smem, size = 0x4, offset = 0x4, fixed_abs, tag = 'smem constant byte address 0x4 - core index']
  #allocation1 [shape = 'u32[144,128]{1,0:T(1,128)}', space=vmem, size = 0x12000, scoped, tag = 'internal scratch']
  #allocation2 [shape = 'f32[36,256]{1,0:T(8,128)}', space=vmem, size = 0xa000, scoped, tag = 'scratch operand']
  %s0 = inlined_call_operand.vmem [shape: f32[2,4,256], index: 0, kind: input, shape index: {}]
  %s1 = inlined_call_operand.vmem [shape: f32[4,36], index: 1, kind: input, shape index: {}]
  %s2 = inlined_call_operand.vmem [shape: f32[4,1], index: 2, kind: input, shape index: {}]
  %s3 = inlined_call_operand.vmem [shape: f32[4,1], index: 3, kind: input, shape index: {}]
  %s4 = inlined_call_operand.vmem [shape: f32[2,4,256], index: 4, kind: output, shape index: {0}]
  %s5 = inlined_call_operand.vmem [shape: f32[2,4,1], index: 5, kind: output, shape index: {1}]
  %s6 = inlined_call_operand.vmem [shape: f32[2,4,1], index: 6, kind: output, shape index: {2}]
  %7 = xla_tuple %s4, %s5, %s6
  %s8 = sld [smem:[#allocation0]]
  $region65: #{basic_block_forward.4} parent=0
    _
  %s10 = ssub.s32 1, %s8
  %s11 = scalar_select 0, %s10, %s8
  loop: start=0, step=1, limit=4
  $region2: #{basic_block_forward.4} parent=0 // loop_pre_header
    _
  $region3: #{basic_block_forward.4} parent=0 // loop_header
    %s13 = sphi 0, %s17
    %p14 = scmp.ge.s32.totalorder %s13, 4
    %s23 = sphi 0, %s25
    %s26 = sphi 0, %s23
    %s27 = sphi 0, %s26
    %s43 = sphi 0, %s27
    %s47 = sphi 0, %s47
    %s49 = sphi 0, %s47
    %s50 = sphi 0, %s49
    %s64 = sphi 0, %s50
    %s68 = sphi 0, %s68
    %s70 = sphi 0, %s68
    %s71 = sphi 0, %s70
    %s85 = sphi 0, %s71
    %s89 = sphi 0, %s89
    %s91 = sphi 0, %s89
    %s92 = sphi 0, %s91
    %s106 = sphi 0, %s92
    %s112 = sphi 0, %s114
    %s115 = sphi 0, %s112
    %s116 = sphi 0, %s115
    %s132 = sphi 0, %s116
    %s138 = sphi 0, %s140
    %s141 = sphi 0, %s138
    %s142 = sphi 0, %s141
    %s158 = sphi 0, %s142
    %s164 = sphi 0, %s166
    %s167 = sphi 0, %s164
    %s168 = sphi 0, %s167
    %s184 = sphi 0, %s168
  $region4: #{basic_block_forward.4} parent=0 // loop_header_branch
    %16 = sbr.rel (%p14) target = $region8
  $region5: #{basic_block_forward.4} parent=0 // loop_body
    %s18 = ssub.s32 %s13, 1
    %s19 = ssub.s32 %s13, 2
    %s20 = sadd.s32 %s13, 1
    %s21 = ssub.s32 %s13, %s20
    %p22 = scmp.eq.s32.totalorder %s21, 0
    %s24 = sadd.s32 %s23, 1
    %s25 = scalar_select %p22, %s23, %s24
    %p28 = pneg %p22
    %p29 = scmp.eq.s32.totalorder %s13, 1
    %p30 = por %p28, %p29
    %p31 = scmp.ne.s32.totalorder %s23, %s26
    %p32 = scmp.eq.s32.totalorder %s13, 0
    %p33 = por %p31, %p32
    %p34 = scmp.ne.s32.totalorder %s23, %s26
    %p35 = scmp.eq.s32.totalorder %s18, 1
    %p36 = por %p34, %p35
    %p37 = scmp.ne.s32.totalorder %s26, %s27
    %p38 = scmp.eq.s32.totalorder %s18, 0
    %p39 = por %p37, %p38
    %p40 = scmp.ne.s32.totalorder %s26, %s27
    %p41 = scmp.eq.s32.totalorder %s19, 1
    %p42 = por %p40, %p41
    %p44 = scmp.ne.s32.totalorder %s27, %s43
    %p45 = scmp.eq.s32.totalorder %s19, 0
    %p46 = por %p44, %p45
    %s48 = sadd.s32 %s47, 1
    %p51 = scmp.eq.s32.totalorder %s13, 1
    %p52 = scmp.ne.s32.totalorder %s47, %s49
    %p53 = scmp.eq.s32.totalorder %s13, 0
    %p54 = por %p52, %p53
    %p55 = scmp.ne.s32.totalorder %s47, %s49
    %p56 = scmp.eq.s32.totalorder %s18, 1
    %p57 = por %p55, %p56
    %p58 = scmp.ne.s32.totalorder %s49, %s50
    %p59 = scmp.eq.s32.totalorder %s18, 0
    %p60 = por %p58, %p59
    %p61 = scmp.ne.s32.totalorder %s49, %s50
    %p62 = scmp.eq.s32.totalorder %s19, 1
    %p63 = por %p61, %p62
    %p65 = scmp.ne.s32.totalorder %s50, %s64
    %p66 = scmp.eq.s32.totalorder %s19, 0
    %p67 = por %p65, %p66
    %s69 = sadd.s32 %s68, 1
    %p72 = scmp.eq.s32.totalorder %s13, 1
    %p73 = scmp.ne.s32.totalorder %s68, %s70
    %p74 = scmp.eq.s32.totalorder %s13, 0
    %p75 = por %p73, %p74
    %p76 = scmp.ne.s32.totalorder %s68, %s70
    %p77 = scmp.eq.s32.totalorder %s18, 1
    %p78 = por %p76, %p77
    %p79 = scmp.ne.s32.totalorder %s70, %s71
    %p80 = scmp.eq.s32.totalorder %s18, 0
    %p81 = por %p79, %p80
    %p82 = scmp.ne.s32.totalorder %s70, %s71
    %p83 = scmp.eq.s32.totalorder %s19, 1
    %p84 = por %p82, %p83
    %p86 = scmp.ne.s32.totalorder %s71, %s85
    %p87 = scmp.eq.s32.totalorder %s19, 0
    %p88 = por %p86, %p87
    %s90 = sadd.s32 %s89, 1
    %p93 = scmp.eq.s32.totalorder %s13, 1
    %p94 = scmp.ne.s32.totalorder %s89, %s91
    %p95 = scmp.eq.s32.totalorder %s13, 0
    %p96 = por %p94, %p95
    %p97 = scmp.ne.s32.totalorder %s89, %s91
    %p98 = scmp.eq.s32.totalorder %s18, 1
    %p99 = por %p97, %p98
    %p100 = scmp.ne.s32.totalorder %s91, %s92
    %p101 = scmp.eq.s32.totalorder %s18, 0
    %p102 = por %p100, %p101
    %p103 = scmp.ne.s32.totalorder %s91, %s92
    %p104 = scmp.eq.s32.totalorder %s19, 1
    %p105 = por %p103, %p104
    %p107 = scmp.ne.s32.totalorder %s92, %s106
    %p108 = scmp.eq.s32.totalorder %s19, 0
    %p109 = por %p107, %p108
    %s110 = ssub.s32 %s13, %s20
    %p111 = scmp.eq.s32.totalorder %s110, 0
    %s113 = sadd.s32 %s112, 1
    %s114 = scalar_select %p111, %s112, %s113
    %p117 = pneg %p111
    %p118 = scmp.eq.s32.totalorder %s13, 1
    %p119 = por %p117, %p118
    %p120 = scmp.ne.s32.totalorder %s112, %s115
    %p121 = scmp.eq.s32.totalorder %s13, 0
    %p122 = por %p120, %p121
    %p123 = scmp.ne.s32.totalorder %s112, %s115
    %p124 = scmp.eq.s32.totalorder %s18, 1
    %p125 = por %p123, %p124
    %p126 = scmp.ne.s32.totalorder %s115, %s116
    %p127 = scmp.eq.s32.totalorder %s18, 0
    %p128 = por %p126, %p127
    %p129 = scmp.ne.s32.totalorder %s115, %s116
    %p130 = scmp.eq.s32.totalorder %s19, 1
    %p131 = por %p129, %p130
    %p133 = scmp.ne.s32.totalorder %s116, %s132
    %p134 = scmp.eq.s32.totalorder %s19, 0
    %p135 = por %p133, %p134
    %s136 = ssub.s32 %s13, %s20
    %p137 = scmp.eq.s32.totalorder %s136, 0
    %s139 = sadd.s32 %s138, 1
    %s140 = scalar_select %p137, %s138, %s139
    %p143 = pneg %p137
    %p144 = scmp.eq.s32.totalorder %s13, 1
    %p145 = por %p143, %p144
    %p146 = scmp.ne.s32.totalorder %s138, %s141
    %p147 = scmp.eq.s32.totalorder %s13, 0
    %p148 = por %p146, %p147
    %p149 = scmp.ne.s32.totalorder %s138, %s141
    %p150 = scmp.eq.s32.totalorder %s18, 1
    %p151 = por %p149, %p150
    %p152 = scmp.ne.s32.totalorder %s141, %s142
    %p153 = scmp.eq.s32.totalorder %s18, 0
    %p154 = por %p152, %p153
    %p155 = scmp.ne.s32.totalorder %s141, %s142
    %p156 = scmp.eq.s32.totalorder %s19, 1
    %p157 = por %p155, %p156
    %p159 = scmp.ne.s32.totalorder %s142, %s158
    %p160 = scmp.eq.s32.totalorder %s19, 0
    %p161 = por %p159, %p160
    %s162 = ssub.s32 %s13, %s20
    %p163 = scmp.eq.s32.totalorder %s162, 0
    %s165 = sadd.s32 %s164, 1
    %s166 = scalar_select %p163, %s164, %s165
    %p169 = pneg %p163
    %p170 = scmp.eq.s32.totalorder %s13, 1
    %p171 = por %p169, %p170
    %p172 = scmp.ne.s32.totalorder %s164, %s167
    %p173 = scmp.eq.s32.totalorder %s13, 0
    %p174 = por %p172, %p173
    %p175 = scmp.ne.s32.totalorder %s164, %s167
    %p176 = scmp.eq.s32.totalorder %s18, 1
    %p177 = por %p175, %p176
    %p178 = scmp.ne.s32.totalorder %s167, %s168
    %p179 = scmp.eq.s32.totalorder %s18, 0
    %p180 = por %p178, %p179
    %p181 = scmp.ne.s32.totalorder %s167, %s168
    %p182 = scmp.eq.s32.totalorder %s19, 1
    %p183 = por %p181, %p182
    %p185 = scmp.ne.s32.totalorder %s168, %s184
    %p186 = scmp.eq.s32.totalorder %s19, 0
    %p187 = por %p185, %p186
    %p188 = scmp.le.s32.totalorder 1, %s13
    %p189 = scmp.lt.s32.totalorder %s13, 3
    %p190 = pnand %p188, %p189
    %p191 = pneg %p190
    // Predicated region
    $region9: #{basic_block_forward.4} parent=5 // pred_check
      _
    $region10: #{basic_block_forward.4} parent=5 // pred_check_branch
      %193 = sbr.rel (%p190) target = $region12
    $region11: #{basic_block_forward.4} parent=5 // pred_region
      %s194 = ssub.s32 %s13, 1
      // Predicated region
      $region13: #{basic_block_forward.4} parent=11 // pred_check
        %p195 = pneg %p60
      $region14: #{basic_block_forward.4} parent=11 // pred_check_branch
        %197 = sbr.rel (%p195) target = $region16
      $region15: #{basic_block_forward.4} parent=11 // pred_region
        _
      $region16: #{basic_block_forward.4} parent=11 // pred_fallthru
        _
      // Predicated region
      $region17: #{basic_block_forward.4} parent=11 // pred_check
        %p198 = pneg %p81
      $region18: #{basic_block_forward.4} parent=11 // pred_check_branch
        %200 = sbr.rel (%p198) target = $region20
      $region19: #{basic_block_forward.4} parent=11 // pred_region
        _
      $region20: #{basic_block_forward.4} parent=11 // pred_fallthru
        _
      // Predicated region
      $region21: #{basic_block_forward.4} parent=11 // pred_check
        %p201 = pneg %p102
      $region22: #{basic_block_forward.4} parent=11 // pred_check_branch
        %203 = sbr.rel (%p201) target = $region24
      $region23: #{basic_block_forward.4} parent=11 // pred_region
        _
      $region24: #{basic_block_forward.4} parent=11 // pred_fallthru
        _
    $region12: #{basic_block_forward.4} parent=5 // pred_fallthru
      _
    %p204 = scmp.lt.s32.totalorder %s13, 2
    // Predicated region
    $region25: #{basic_block_forward.4} parent=5 // pred_check
      %p205 = pneg %p204
    $region26: #{basic_block_forward.4} parent=5 // pred_check_branch
      %207 = sbr.rel (%p205) target = $region28
    $region27: #{basic_block_forward.4} parent=5 // pred_region
      // Predicated region
      $region29: #{basic_block_forward.4} parent=27 // pred_check
        %p208 = pneg %p33
      $region30: #{basic_block_forward.4} parent=27 // pred_check_branch
        %210 = sbr.rel (%p208) target = $region32
      $region31: #{basic_block_forward.4} parent=27 // pred_region
        %p211 = scmp.lt.s32.totalorder %s13, 1
        %s212 = scalar_select %p211, %s13, 1
        %s213 = smul.addr %s212, 2
        %s214 = smul.addr %s213, 4
        %s215 = scalar_lea.vmem %s0, %s214
      $region32: #{basic_block_forward.4} parent=27 // pred_fallthru
        _
    $region28: #{basic_block_forward.4} parent=5 // pred_fallthru
      _
    %p216 = scmp.le.s32.totalorder 1, %s13
    %p217 = scmp.lt.s32.totalorder %s13, 3
    %p218 = pnand %p216, %p217
    %p219 = pneg %p218
    // Predicated region
    $region33: #{basic_block_forward.4} parent=5 // pred_check
      _
    $region34: #{basic_block_forward.4} parent=5 // pred_check_branch
      %221 = sbr.rel (%p218) target = $region36
    $region35: #{basic_block_forward.4} parent=5 // pred_region
      %s222 = ssub.s32 %s13, 1
      %p223 = scmp.lt.s32.totalorder %s18, 1
      %s224 = scalar_select %p223, %s18, 1
      %s225 = smul.addr %s224, 2
      %s226 = smul.addr %s225, 4
      %s227 = scalar_lea.vmem %s0, %s226
      %p228 = pneg %p39
      %p229 = pneg %p36
      %p230 = pneg %p60
      %p231 = pneg %p57
      %p232 = pneg %p81
      %p233 = pneg %p78
      %p234 = pneg %p102
      %p235 = pneg %p99
      %p236 = pneg %p128
      %p237 = pneg %p125
      %p238 = scmp.lt.s32.totalorder %s18, 1
      %s239 = scalar_select %p238, %s18, 1
      %s240 = smul.addr %s239, 2
      %s241 = smul.addr %s240, 4
      %s242 = scalar_lea.vmem %s4, %s241
      %p243 = pneg %p154
      %p244 = pneg %p151
      %p245 = scmp.lt.s32.totalorder %s18, 1
      %s246 = scalar_select %p245, %s18, 1
      %s247 = smul.addr %s246, 4
      %s248 = scalar_lea.vmem %s5, %s247
      %p249 = pneg %p180
      %p250 = pneg %p177
      %p251 = scmp.lt.s32.totalorder %s18, 1
      %s252 = scalar_select %p251, %s18, 1
      %s253 = smul.addr %s252, 4
      %s254 = scalar_lea.vmem %s6, %s253
      %p255 = scmp.lt.s32.totalorder %s18, 1
      %s256 = scalar_select %p255, %s18, 1
      %s257 = smul.addr %s256, 2
      %s258 = smul.addr %s257, 4
      %s259 = scalar_lea.vmem %s0, %s258
      %p260 = scmp.lt.s32.totalorder %s18, 1
      %s261 = scalar_select %p260, %s18, 1
      %s262 = smul.addr %s261, 2
      %s263 = smul.addr %s262, 4
      %s264 = scalar_lea.vmem %s4, %s263
      %p265 = scmp.lt.s32.totalorder %s18, 1
      %s266 = scalar_select %p265, %s18, 1
      %s267 = smul.addr %s266, 4
      %s268 = scalar_lea.vmem %s5, %s267
      %p269 = scmp.lt.s32.totalorder %s18, 1
      %s270 = scalar_select %p269, %s18, 1
      %s271 = smul.addr %s270, 4
      %s272 = scalar_lea.vmem %s6, %s271
      %v273 = vld [vmem:[%s259] sm:$0xff]
      %v274 = vld [vmem:[%s2] sm:$0xf]
      %276 = vset.pattern.permute.xlu0 0
      %277 = vperm.xlu0 %276, %v274
      %v278 = vpop.permute.xlu0 %277
      %v280 = vunpack.c.l.s4 839922192
      %v281 = vunpack.c.0.s8 %v280
      %v282 = vlaneseq
      %v283 = vshrl.u32 %v282, 7
      %v284 = vsub.s32 %v281, %v283
      %v285 = vrot.slane %v278, %v284
      %v287 = vmul.f32 %v273, %v285
      %v288 = vld [vmem:[%s3] sm:$0xf]
      %290 = vset.pattern.permute.xlu0 0
      %291 = vperm.xlu0 %290, %v288
      %v292 = vpop.permute.xlu0 %291
      %v294 = vunpack.c.l.s4 839922192
      %v295 = vunpack.c.0.s8 %v294
      %v296 = vlaneseq
      %v297 = vshrl.u32 %v296, 7
      %v298 = vsub.s32 %v295, %v297
      %v299 = vrot.slane %v292, %v298
      %v301 = vadd.f32 %v287, %v299
      %v302 = vmax.f32 %v301, 0.0
      %v303 = vlaneseq
      %v304 = vand.u32 %v303, 127
      %v305 = vadd.s32 %v304, 128
      %v306 = vand.u32 %v304, 15
      %v307 = vand.u32 %v305, 15
      %308 = vst [vmem:[#allocation2] sm:$0xff] 0.0
      %309 = vst [vmem:[#allocation2 + $0x8] sm:$0xff] 0.0
      %310 = vst [vmem:[#allocation2 + $0x10] sm:$0xff] 0.0
      %311 = vst [vmem:[#allocation2 + $0x18] sm:$0xff] 0.0
      %312 = vst [vmem:[#allocation2 + $0x20] sm:$0xff] 0.0
      %313 = vst [vmem:[#allocation2 + $0x28] sm:$0xff] 0.0
      %314 = vst [vmem:[#allocation2 + $0x30] sm:$0xff] 0.0
      %315 = vst [vmem:[#allocation2 + $0x38] sm:$0xff] 0.0
      %316 = vst [vmem:[#allocation2 + $0x40] sm:$0xf] 0.0
      %317 = vst [vmem:[#allocation2 + $0x48] sm:$0xf] 0.0
      %vm318 = vcmp.le.s32.totalorder %v306, 14
      %vm319 = vcmp.le.s32.totalorder %v307, 14
      %v320 = vsel %vm318, 1, 0
      %v321 = vsel %vm319, 1, 0
      %vm322 = vcmp.eq.s32.totalorder %v320, 1
      %vm323 = vcmp.eq.s32.totalorder %v321, 1
      %v325 = vcombine.high %v302, %v302
      %v327 = vsel %vm322, %v302, 0.0
      %v328 = vsel %vm323, %v325, 0.0
      %331 = vrot.lane.b32.xlu0 %v327, 17
      %v332 = vpop.permute.xlu0 %331
      %333 = vrot.lane.b32.xlu0 %v328, 17
      %v334 = vpop.permute.xlu0 %333
      %vm335 = vcmask 138240
      %v336 = vsel %vm335, %v332, %v334
      %vm339 = vcmask 1043592
      %340 = vst.msk [vmem:[#allocation2] sm:$0xf] %vm339, %v332
      %341 = vst [vmem:[#allocation2 + $0x8] sm:$0xf] %v336
      %v342 = vcombine.low %v302, %v302
      %343 = vrot.lane.b32.xlu0 %v342, 16
      %v344 = vpop.permute.xlu0 %343
      %345 = vrot.lane.b32.xlu0 %v302, 16
      %v346 = vpop.permute.xlu0 %345
      %vm347 = vcmask 130048
      %v348 = vsel %vm347, %v344, %v346
      %vm351 = vcmask 1047684
      %352 = vst.msk [vmem:[#allocation2] sm:$0xf0] %vm351, %v344
      %353 = vst [vmem:[#allocation2 + $0x8] sm:$0xf0] %v348
      %vm354 = vcmp.ge.s32.totalorder %v306, 1
      %vm355 = vcmp.ge.s32.totalorder %v307, 1
      %v356 = vsel %vm354, 1, 0
      %v357 = vsel %vm355, 1, 0
      %vm358 = vcmp.eq.s32.totalorder %v356, 1
      %vm359 = vcmp.eq.s32.totalorder %v357, 1
      %v360 = vsel %vm358, %v302, 0.0
      %v361 = vsel %vm359, %v325, 0.0
      %364 = vrot.lane.b32.xlu0 %v360, 15
      %v365 = vpop.permute.xlu0 %364
      %366 = vrot.lane.b32.xlu0 %v361, 15
      %v367 = vpop.permute.xlu0 %366
      %vm368 = vcmask 121856
      %v369 = vsel %vm368, %v365, %v367
      %vm372 = vcmask 1043576
      %373 = vst.msk [vmem:[#allocation2 + $0x10] sm:$0xf] %vm372, %v365
      %374 = vst [vmem:[#allocation2 + $0x18] sm:$0xf] %v369
      %v375 = vrot.slane %v327, 4
      %v376 = vrot.slane %v328, 4
      %377 = vrot.lane.b32.xlu0 %v375, 1
      %v378 = vpop.permute.xlu0 %377
      %379 = vrot.lane.b32.xlu0 %v376, 1
      %v380 = vpop.permute.xlu0 %379
      %vm381 = vcmask 7168
      %v382 = vsel %vm381, %v378, %v380
      %vm385 = vcmask 1047564
      %386 = vst.msk [vmem:[#allocation2 + $0x10] sm:$0xf0] %vm385, %v378
      %387 = vst [vmem:[#allocation2 + $0x18] sm:$0xf0] %v382
      %388 = vst [vmem:[#allocation2 + $0x20] sm:$0xf] %v302
      %389 = vst [vmem:[#allocation2 + $0x28] sm:$0xf] %v325
      %v390 = vrot.slane %v360, 4
      %v391 = vrot.slane %v361, 4
      %392 = vrot.lane.b32.xlu0 %v390, 127
      %v393 = vpop.permute.xlu0 %392
      %394 = vrot.lane.b32.xlu0 %v391, 127
      %v395 = vpop.permute.xlu0 %394
      %vm396 = vcmask 1039360
      %v397 = vsel %vm396, %v393, %v395
      %400 = vst [vmem:[#allocation2 + $0x20] sm:$0xf0] %v397
      %vm401 = vcmask 1039364
      %402 = vst.msk [vmem:[#allocation2 + $0x28] sm:$0xf0] %vm401, %v395
      %403 = vrot.lane.b32.xlu0 %v327, 113
      %v404 = vpop.permute.xlu0 %403
      %405 = vrot.lane.b32.xlu0 %v328, 113
      %v406 = vpop.permute.xlu0 %405
      %vm407 = vcmask 924672
      %v408 = vsel %vm407, %v404, %v406
      %411 = vst [vmem:[#allocation2 + $0x30] sm:$0xf] %v408
      %vm412 = vcmask 920576
      %413 = vst.msk [vmem:[#allocation2 + $0x38] sm:$0xf] %vm412, %v406
      %414 = vrot.lane.b32.xlu0 %v342, 112
      %v415 = vpop.permute.xlu0 %414
      %416 = vrot.lane.b32.xlu0 %v302, 112
      %v417 = vpop.permute.xlu0 %416
      %vm418 = vcmask 916480
      %v419 = vsel %vm418, %v415, %v417
      %422 = vst [vmem:[#allocation2 + $0x30] sm:$0xf0] %v419
      %vm423 = vcmask 916484
      %424 = vst.msk [vmem:[#allocation2 + $0x38] sm:$0xf0] %vm423, %v417
      %425 = vrot.lane.b32.xlu0 %v360, 111
      %v426 = vpop.permute.xlu0 %425
      %427 = vrot.lane.b32.xlu0 %v361, 111
      %v428 = vpop.permute.xlu0 %427
      %vm429 = vcmask 908288
      %v430 = vsel %vm429, %v426, %v428
      %433 = vst [vmem:[#allocation2 + $0x40] sm:$0xf] %v430
      %vm434 = vcmask 904192
      %435 = vst.msk [vmem:[#allocation2 + $0x48] sm:$0xf] %vm434, %v428
      %v436 = vld [vmem:[%s1] sm:$0xf]
      %v437 = vld [vmem:[#allocation2] sm:$0xff]
      %v438 = vld [vmem:[#allocation2 + $0x8] sm:$0xff]
      %v439 = vld [vmem:[#allocation2 + $0x10] sm:$0xff]
      %v440 = vld [vmem:[#allocation2 + $0x18] sm:$0xff]
      %v441 = vld [vmem:[#allocation2 + $0x20] sm:$0xff]
      %v442 = vld [vmem:[#allocation2 + $0x28] sm:$0xff]
      %v443 = vld [vmem:[#allocation2 + $0x30] sm:$0xff]
      %v444 = vld [vmem:[#allocation2 + $0x38] sm:$0xff]
      %v445 = vld [vmem:[#allocation2 + $0x40] sm:$0xf]
      %v446 = vld [vmem:[#allocation2 + $0x48] sm:$0xf]
      %vm447 = vcmask 293888
      %v449 = vsel %vm447, %v436, 0
      %vm451 = vcmask 1043456
      %v453 = vsel %vm451, %v445, 0
      %v456 = vsel %vm451, %v446, 0
      %458 = vmatprep.subr.mxu0 %v438
      %459 = vmatpush1.msra.mxu0 %v437
      %460 = vmatprep.subr.mxu0 %v440
      %461 = vmatpush1.msra.mxu0 %v439
      %462 = vmatprep.subr.mxu0 %v442
      %463 = vmatpush1.msra.mxu0 %v441
      %464 = vmatprep.subr.mxu0 %v444
      %465 = vmatpush1.msra.mxu0 %v443
      %466 = vmatprep.subr.mxu0 %v456
      %467 = vmatpush1.msra.mxu0 %v453
      %468 = vmatprep.subr.mxu0 0.0
      %469 = vmatpush1.msra.mxu0 0.0
      %470 = vmatprep.subr.mxu0 0.0
      %471 = vmatpush1.msra.mxu0 0.0
      %472 = vmatprep.subr.mxu0 0.0
      %473 = vmatpush1.msra.mxu0 0.0
      %474 = vmatprep.subr.mxu0 0.0
      %475 = vmatpush1.msra.mxu0 0.0
      %476 = vmatprep.subr.mxu0 0.0
      %477 = vmatpush1.msra.mxu0 0.0
      %478 = vmatprep.subr.mxu0 0.0
      %479 = vmatpush1.msra.mxu0 0.0
      %480 = vmatprep.subr.mxu0 0.0
      %481 = vmatpush1.msra.mxu0 0.0
      %482 = vmatprep.subr.mxu0 0.0
      %483 = vmatpush1.msra.mxu0 0.0
      %484 = vmatprep.subr.mxu0 0.0
      %485 = vmatpush1.msra.mxu0 0.0
      %486 = vmatprep.subr.mxu0 0.0
      %487 = vmatpush1.msra.mxu0 0.0
      %488 = vmatprep.subr.mxu0 0.0
      %489 = vmatpush1.msra.mxu0 0.0
      %490 = vmatprep.subr.mxu0 0.0
      %491 = vmatpush1.msra.mxu0 0.0
      %492 = vmatprep.subr.mxu0 0.0
      %493 = vmatpush1.msra.mxu0 0.0
      %494 = vmatprep.subr.mxu0 0.0
      %495 = vmatpush1.msra.mxu0 0.0
      %496 = vmatprep.subr.mxu0 0.0
      %497 = vmatpush1.msra.mxu0 0.0
      %498 = vmatprep.subr.mxu0 0.0
      %499 = vmatpush1.msra.mxu0 0.0
      %500 = vmatprep.subr.mxu0 0.0
      %501 = vmatpush1.msra.mxu0 0.0
      %502 = vmatprep.subr.mxu0 0.0
      %503 = vmatpush1.msra.mxu0 0.0
      %504 = vmatprep.subr.mxu0 0.0
      %505 = vmatpush1.msra.mxu0 0.0
      %506 = vmatprep.subr.mxu0 0.0
      %507 = vmatpush1.msra.mxu0 0.0
      %508 = vmatprep.subr.mxu0 0.0
      %509 = vmatpush1.msra.mxu0 0.0
      %510 = vmatprep.subr.mxu0 0.0
      %511 = vmatpush1.msra.mxu0 0.0
      %512 = vmatprep.subr.mxu0 0.0
      %513 = vmatpush1.msra.mxu0 0.0
      %514 = vmatprep.subr.mxu0 0.0
      %515 = vmatpush1.msra.mxu0 0.0
      %516 = vmatprep.subr.mxu0 0.0
      %517 = vmatpush1.msra.mxu0 0.0
      %518 = vmatprep.subr.mxu0 0.0
      %519 = vmatpush1.msra.mxu0 0.0
      %520 = vmatprep.subr.mxu0 0.0
      %521 = vmatpush1.msra.mxu0 0.0
      %522 = vmatprep.mubr.f32.mxu0 0.0
      %523 = vmatmul.mubr.f32.gmra.mrb[0].mxu0 %v449
      %v524 = vpop.f32.mrb[0].mxu0
      %v525 = vadd.f32 0.0, %v524
      %v526 = vpop.f32.mrb[0].mxu0
      %v527 = vadd.f32 0.0, %v526
      %528 = vdwg.mxu0
      %v531 = vcombine.low %v525, %v527
      %533 = vst [vmem:[%s264] sm:$0xff] %v531
      %v534 = vsel %vm451, %v525, 0.0
      %v535 = vsel %vm451, %v527, 0.0
      %v536 = vadd.f32 %v534, %v535
      %537 = vadd.xlane.f32.xlu0 %v536
      %v538 = vpop.xlane.xlu0 %537
      %vm539 = vcmask 3072
      %540 = vst.msk [vmem:[%s268] sm:$0xf] %vm539, %v538
      %v541 = vmul.f32 %v525, %v525
      %v542 = vmul.f32 %v527, %v527
      %v543 = vsel %vm451, %v541, 0.0
      %v544 = vsel %vm451, %v542, 0.0
      %v545 = vadd.f32 %v543, %v544
      %546 = vadd.xlane.f32.xlu0 %v545
      %v547 = vpop.xlane.xlu0 %546
      %548 = vst.msk [vmem:[%s272] sm:$0xf] %vm539, %v547
      %p549 = scmp.lt.s32.totalorder %s18, 1
      %s550 = scalar_select %p549, %s18, 1
      %s551 = smul.addr %s550, 2
      %s552 = smul.addr %s551, 4
      %s553 = scalar_lea.vmem %s4, %s552
      %p554 = scmp.lt.s32.totalorder %s18, 1
      %s555 = scalar_select %p554, %s18, 1
      %s556 = smul.addr %s555, 4
      %s557 = scalar_lea.vmem %s5, %s556
      %p558 = scmp.lt.s32.totalorder %s18, 1
      %s559 = scalar_select %p558, %s18, 1
      %s560 = smul.addr %s559, 4
      %s561 = scalar_lea.vmem %s6, %s560
      // Predicated region
      $region37: #{basic_block_forward.4} parent=35 // pred_check
        %p562 = pneg %p125
      $region38: #{basic_block_forward.4} parent=35 // pred_check_branch
        %564 = sbr.rel (%p562) target = $region40
      $region39: #{basic_block_forward.4} parent=35 // pred_region
        _
      $region40: #{basic_block_forward.4} parent=35 // pred_fallthru
        _
      // Predicated region
      $region41: #{basic_block_forward.4} parent=35 // pred_check
        %p565 = pneg %p151
      $region42: #{basic_block_forward.4} parent=35 // pred_check_branch
        %567 = sbr.rel (%p565) target = $region44
      $region43: #{basic_block_forward.4} parent=35 // pred_region
        _
      $region44: #{basic_block_forward.4} parent=35 // pred_fallthru
        _
      // Predicated region
      $region45: #{basic_block_forward.4} parent=35 // pred_check
        %p568 = pneg %p177
      $region46: #{basic_block_forward.4} parent=35 // pred_check_branch
        %570 = sbr.rel (%p568) target = $region48
      $region47: #{basic_block_forward.4} parent=35 // pred_region
        _
      $region48: #{basic_block_forward.4} parent=35 // pred_fallthru
        _
    $region36: #{basic_block_forward.4} parent=5 // pred_fallthru
      _
    %p571 = scmp.le.s32.totalorder 2, %s13
    // Predicated region
    $region49: #{basic_block_forward.4} parent=5 // pred_check
      %p572 = pneg %p571
    $region50: #{basic_block_forward.4} parent=5 // pred_check_branch
      %574 = sbr.rel (%p572) target = $region52
    $region51: #{basic_block_forward.4} parent=5 // pred_region
      %s575 = ssub.s32 %s13, 2
      // Predicated region
      $region53: #{basic_block_forward.4} parent=51 // pred_check
        %p576 = pneg %p131
      $region54: #{basic_block_forward.4} parent=51 // pred_check_branch
        %578 = sbr.rel (%p576) target = $region56
      $region55: #{basic_block_forward.4} parent=51 // pred_region
        %p579 = scmp.lt.s32.totalorder %s19, 1
        %s580 = scalar_select %p579, %s19, 1
        %s581 = smul.addr %s580, 2
        %s582 = smul.addr %s581, 4
        %s583 = scalar_lea.vmem %s4, %s582
      $region56: #{basic_block_forward.4} parent=51 // pred_fallthru
        _
      // Predicated region
      $region57: #{basic_block_forward.4} parent=51 // pred_check
        %p584 = pneg %p157
      $region58: #{basic_block_forward.4} parent=51 // pred_check_branch
        %586 = sbr.rel (%p584) target = $region60
      $region59: #{basic_block_forward.4} parent=51 // pred_region
        %p587 = scmp.lt.s32.totalorder %s19, 1
        %s588 = scalar_select %p587, %s19, 1
        %s589 = smul.addr %s588, 4
        %s590 = scalar_lea.vmem %s5, %s589
      $region60: #{basic_block_forward.4} parent=51 // pred_fallthru
        _
      // Predicated region
      $region61: #{basic_block_forward.4} parent=51 // pred_check
        %p591 = pneg %p183
      $region62: #{basic_block_forward.4} parent=51 // pred_check_branch
        %593 = sbr.rel (%p591) target = $region64
      $region63: #{basic_block_forward.4} parent=51 // pred_region
        %p594 = scmp.lt.s32.totalorder %s19, 1
        %s595 = scalar_select %p594, %s19, 1
        %s596 = smul.addr %s595, 4
        %s597 = scalar_lea.vmem %s6, %s596
      $region64: #{basic_block_forward.4} parent=51 // pred_fallthru
        _
    $region52: #{basic_block_forward.4} parent=5 // pred_fallthru
      _
  $region6: #{basic_block_forward.4} parent=0 // loop_footer
    %s17 = sadd.s32 1, %s13
  $region7: #{basic_block_forward.4} parent=0 // loop_footer_branch
    %12 = sbr.rel target = $region3
  $region8: #{basic_block_forward.4} parent=0 // loop_exit
    _

</llo_original>
